<compile_context>
chip_gen: v5e
topology: v5e:2x2
jax: 0.10.0
libtpu: 0.0.40
codegen_flags: <defaults>
</compile_context>

<pallas_src>
import jax
import jax.numpy as jnp
from jax import lax
from jax.experimental import pallas as pl
from jax.experimental.pallas import tpu as pltpu

# ------------------------- small config (scaled-down defaults) ----------------
OUT_CHANNELS   = 16            # module default 128
NUM_BLOCKS     = 2             # Recurrent iterations, module default 16
ENC_KERNEL_ARG = 4
SAMPLE_RATE    = 8000
NUM_SOURCES    = 2
ENC_KERNEL     = ENC_KERNEL_ARG * SAMPLE_RATE // 1000   # 32
ENC_STRIDE     = ENC_KERNEL // 4                        # 8
N_CHUNKS       = ENC_KERNEL // ENC_STRIDE               # 4
ENC_NUM_BASIS  = ENC_KERNEL // 2 + 1                    # 17
GLN_EPS        = 1e-8

PACK_ROWS  = 24      # packed per-channel vectors / scalars, rows (>= N, mult of 8)
WPACK_ROWS = 192     # packed weight matrices, rows
MAX_TILE_Q = 1024    # frames per time tile (multiple of 128 -> lane-dense output)


def _round_up(x, m):
    return (x + m - 1) // m * m


# ------------------------------ Pallas kernels --------------------------------
def _encode(win, wenc_ref, L):
    """Encoder Conv1d(1, N, K, stride=K//4) as 4 shifted stride-phase matmuls."""
    s = jnp.zeros((ENC_NUM_BASIS, L), jnp.float32)
    for c in range(N_CHUNKS):
        s = s + jnp.dot(wenc_ref[c], win[:, c:c + L],
                        preferred_element_type=jnp.float32)
    return s                                               # (N, L) f32


def _tdanet_stats_kernel(win_ref, wenc_ref, out_ref):
    """Pass 1: accumulate sum / sum-of-squares of the encoder output (GlobLN stats)."""
    L = win_ref.shape[-1] - (N_CHUNKS - 1)
    win = win_ref[0, 0]                                    # (8, TQ+6) bf16
    s = _encode(win, wenc_ref, L)                          # (N, L) f32

    # left-halo columns (j < 3) belong to the previous tile -> exclude; trailing
    # zero-padded frames produce s == 0 so they contribute nothing.
    lane = lax.broadcasted_iota(jnp.int32, (ENC_NUM_BASIS, L), 1)
    sv = jnp.where(lane >= N_CHUNKS - 1, s, 0.0)

    @pl.when(pl.program_id(1) == 0)
    def _():
        out_ref[...] = jnp.zeros_like(out_ref)

    lane_o = lax.broadcasted_iota(jnp.int32, out_ref.shape, 2)
    out_ref[...] += (jnp.where(lane_o == 0, jnp.sum(sv), 0.0) +
                     jnp.where(lane_o == 1, jnp.sum(sv * sv), 0.0))


def _tdanet_main_kernel(win_ref, wenc_ref, wpack_ref, pack_ref, out_ref):
    """Pass 2: encoder -> GlobLN -> bottleneck -> Recurrent -> mask ->
    masked encoder output -> ConvTranspose1d with fused overlap-add."""
    f32 = jnp.float32
    N, C, S = ENC_NUM_BASIS, OUT_CHANNELS, NUM_SOURCES
    st, nc = ENC_STRIDE, N_CHUNKS
    tq = out_ref.shape[-1]
    L = tq + nc - 1                                        # frames incl. left halo

    win = win_ref[0, 0]                                    # (8, tq+6) bf16
    s = _encode(win, wenc_ref, L)                          # (N, L) f32 (encoder out)

    pack = pack_ref[0]                                     # (PACK_ROWS, 8) f32
    gamma, beta = pack[0:N, 0:1], pack[0:N, 1:2]
    b_bn        = pack[0:C, 2:3]
    cw, cb      = pack[0:C, 3:4], pack[0:C, 4:5]
    b_m0, b_m1  = pack[0:N, 5:6], pack[0:N, 7:8]
    c_alpha, m_alpha = pack[0:1, 6:7], pack[1:2, 6:7]
    mu, istd    = pack[2:3, 6:7], pack[3:4, 6:7]

    # GlobLN (global stats precomputed in pass 1): (s - mu) * rsqrt(var+eps) * g + b
    x = (s - mu) * istd * gamma + beta                     # (N, L)

    # bottleneck Conv1d(N, C, 1)
    x = jnp.dot(wpack_ref[0:C, :], x, preferred_element_type=f32) + b_bn   # (C, L)

    # Recurrent(sm): UConvBlock + concat_block
    mixture = x
    for i in range(NUM_BLOCKS):
        if i == 0:
            # TODO(synk): UConvBlock source was not provided with the module; identity.
            x = x
        else:
            y = (mixture + x) * cw + cb                    # grouped 1x1 conv (per-channel)
            x = jnp.where(y >= 0, y, c_alpha * y)          # PReLU
            # TODO(synk): UConvBlock (identity) would be applied to x here as well.

    # mask_net: PReLU -> Conv1d(C, S*N, 1) (split per source group)
    m = jnp.where(x >= 0, x, m_alpha * x)
    m0 = jnp.dot(wpack_ref[16:16 + N, 0:C], m, preferred_element_type=f32) + b_m0
    m1 = jnp.dot(wpack_ref[40:40 + N, 0:C], m, preferred_element_type=f32) + b_m1

    # ReLU mask * encoder output (per source group, no lane concatenation)
    masked0 = jnp.maximum(m0, 0.0) * s                     # (N, L)
    masked1 = jnp.maximum(m1, 0.0) * s

    # decoder ConvTranspose1d(S*N, S, K, stride) + overlap-add, fused:
    #   y16[s*8+r, i] = sum_d sum_n Wdec[g*N+n, s, (3-d)*8+r] * masked_g[n, i+d]
    y16 = jnp.zeros((S * st, tq), f32)
    for d in range(nc):
        wd0 = wpack_ref[64 + 16 * d:80 + 16 * d, :]        # (S*st, N)
        wd1 = wpack_ref[128 + 16 * d:144 + 16 * d, :]
        y16 = y16 + jnp.dot(wd0, masked0[:, d:d + tq], preferred_element_type=f32)
        y16 = y16 + jnp.dot(wd1, masked1[:, d:d + tq], preferred_element_type=f32)

    # lane-dense stores: (8, tq) per source, tq is a multiple of 128
    for s_idx in range(S):
        out_ref[0, s_idx] = y16[s_idx * st:(s_idx + 1) * st, :]


# ---------------------------- parameter packing --------------------------------
def _pack_weights(params):
    N, C, K, S = ENC_NUM_BASIS, OUT_CHANNELS, ENC_KERNEL, NUM_SOURCES
    st, nc = ENC_STRIDE, N_CHUNKS

    # encoder weight (N, 1, K) -> (4, N, 8) bf16 (chunked by kernel-offset phase)
    A = params["w_enc"][:, 0, :]                                        # (N, K)
    w_encT = jnp.transpose(A.reshape(N, nc, st), (1, 0, 2)).astype(jnp.bfloat16)

    # decoder weight (S*N, S, K) -> (4, S*st, S*N), index d corresponds to c = 3 - d
    Wd = params["w_dec"]
    Wt = jnp.transpose(Wd, (1, 2, 0)).reshape(S, nc, st, S * N)          # [s, c, r, cin]
    Wt = Wt[:, ::-1]                                                     # c -> d = 3 - c
    Wt = jnp.transpose(Wt, (1, 0, 2, 3)).reshape(nc, S * st, S * N)      # (4, 16, 34)
    wdec0, wdec1 = Wt[:, :, :N], Wt[:, :, N:]

    # single packed f32 weight slab (bottleneck, mask, decoder)
    wpack = jnp.zeros((WPACK_ROWS, N), jnp.float32)
    wpack = wpack.at[0:C, :].set(params["w_bn"])                         # (C, N)
    wpack = wpack.at[16:16 + N, 0:C].set(params["w_mask"][:N])           # (N, C)
    wpack = wpack.at[40:40 + N, 0:C].set(params["w_mask"][N:])           # (N, C)
    for d in range(nc):
        wpack = wpack.at[64 + 16 * d:80 + 16 * d, :].set(wdec0[d])
        wpack = wpack.at[128 + 16 * d:144 + 16 * d, :].set(wdec1[d])

    # packed per-channel vectors / scalars (GlobLN stats filled per call)
    pack = jnp.zeros((PACK_ROWS, 8), jnp.float32)
    pack = pack.at[0:N, 0].set(params["gln_gamma"])
    pack = pack.at[0:N, 1].set(params["gln_beta"])
    pack = pack.at[0:C, 2].set(params["b_bn"])
    pack = pack.at[0:C, 3].set(params["concat_w"])
    pack = pack.at[0:C, 4].set(params["concat_b"])
    pack = pack.at[0:N, 5].set(params["b_mask"][:N])
    pack = pack.at[0:N, 7].set(params["b_mask"][N:])
    pack = pack.at[0, 6].set(params["concat_alpha"])
    pack = pack.at[1, 6].set(params["mask_alpha"])
    return w_encT, wpack, pack


def init_params(key):
    N, C, K, S = ENC_NUM_BASIS, OUT_CHANNELS, ENC_KERNEL, NUM_SOURCES
    ks = jax.random.split(key, 6)

    def xavier(k, shape, fan_in, fan_out):
        bound = (6.0 / (fan_in + fan_out)) ** 0.5
        return jax.random.uniform(k, shape, jnp.float32, -bound, bound)

    return dict(
        w_enc=xavier(ks[0], (N, 1, K), K, N * K),                 # PyTorch (N, 1, K)
        w_dec=xavier(ks[1], (S * N, S, K), S * N * K, S * K),     # PyTorch (S*N, S, K)
        gln_gamma=jnp.ones((N,), jnp.float32),
        gln_beta=jnp.zeros((N,), jnp.float32),
        w_bn=0.1 * jax.random.normal(ks[2], (C, N), jnp.float32),
        b_bn=jnp.zeros((C,), jnp.float32),
        concat_w=0.5 + 0.1 * jax.random.normal(ks[3], (C,), jnp.float32),
        concat_b=jnp.zeros((C,), jnp.float32),
        concat_alpha=jnp.float32(0.25),
        mask_alpha=jnp.float32(0.25),
        w_mask=0.1 * jax.random.normal(ks[4], (S * N, C), jnp.float32),
        b_mask=jnp.zeros((S * N,), jnp.float32),
    )


# --------------------------------- forward ------------------------------------
def _tdanet_forward(input_wav, params):
    B, nsample = input_wav.shape
    K, st, nc = ENC_KERNEL, ENC_STRIDE, N_CHUNKS
    N, C, S = ENC_NUM_BASIS, OUT_CHANNELS, NUM_SOURCES

    # ---- pad_input (window=K, stride=K//4) + encoder conv padding (K//2) ----
    rest = K - (st + nsample % K) % K
    x = input_wav
    if rest > 0:
        x = jnp.concatenate([x, jnp.zeros((B, rest), x.dtype)], axis=1)
    aux = jnp.zeros((B, K - st), x.dtype)
    x = jnp.concatenate([aux, x, aux], axis=1)
    pad = K // 2
    x = jnp.pad(x, ((0, 0), (pad, pad)))
    Lc = x.shape[1]
    T = (Lc - K) // st + 1                       # encoder output frames

    # ---- time tiling (lane-dense output: TQ is a multiple of 128) ----
    T_need = T + nc - 1                          # uncropped ConvT output, in stride rows
    TQ = min(MAX_TILE_Q, _round_up(T_need, 128))
    T_pad = _round_up(T_need, TQ)
    nQ = T_pad // TQ

    # ---- near-duplication-free stride-phase windows (bf16), built from the wave ----
    halo = (nc - 1) * st                         # 24-sample left halo (zero frames)
    total = (T_pad + 2 * (nc - 1)) * st
    whb = jnp.pad(x, ((0, 0), (halo, total - halo - Lc)))
    w2 = whb.reshape(B, T_pad + 2 * (nc - 1), st)
    row_idx = jnp.arange(nQ)[:, None] * TQ + jnp.arange(TQ + 2 * (nc - 1))[None, :]
    windows = jnp.transpose(w2[:, row_idx, :], (0, 1, 3, 2)).astype(jnp.bfloat16)
    # windows: (B, nQ, 8, TQ+6)

    w_encT, wpack, pack = _pack_weights(params)

    win_spec = pl.BlockSpec((1, 1, st, TQ + 2 * (nc - 1)), lambda b, q: (b, q, 0, 0))
    wenc_spec = pl.BlockSpec((nc, N, st), lambda b, q: (0, 0, 0))

    # ---- pass 1: GlobLN statistics ----
    stats = pl.pallas_call(
        _tdanet_stats_kernel,
        out_shape=jax.ShapeDtypeStruct((B, 8, 128), jnp.float32),
        grid_spec=pltpu.PrefetchScalarGridSpec(
            num_scalar_prefetch=0,
            grid=(B, nQ),
            in_specs=[win_spec, wenc_spec],
            out_specs=pl.BlockSpec((1, 8, 128), lambda b, q: (b, 0, 0)),
        ),
        compiler_params=pltpu.CompilerParams(
            dimension_semantics=("parallel", "arbitrary")),
    )(windows, w_encT)

    cnt = jnp.float32(N * T)
    mu = stats[:, 0, 0] / cnt
    var = jnp.maximum(stats[:, 0, 1] / cnt - mu * mu, 0.0)   # single-pass E[x^2]-mu^2
    inv_std = lax.rsqrt(var + GLN_EPS)

    pack_b = jnp.tile(pack[None], (B, 1, 1))
    pack_b = pack_b.at[:, 2, 6].set(mu).at[:, 3, 6].set(inv_std)

    # ---- pass 2: fused forward + decoder with in-kernel overlap-add ----
    out4 = pl.pallas_call(
        _tdanet_main_kernel,
        out_shape=jax.ShapeDtypeStruct((B, S, st, T_pad), jnp.float32),
        grid_spec=pltpu.PrefetchScalarGridSpec(
            num_scalar_prefetch=0,
            grid=(B, nQ),
            in_specs=[
                win_spec,
                wenc_spec,
                pl.BlockSpec((WPACK_ROWS, N), lambda b, q: (0, 0)),
                pl.BlockSpec((1, PACK_ROWS, 8), lambda b, q: (b, 0, 0)),
            ],
            out_specs=pl.BlockSpec((1, S, st, TQ), lambda b, q: (b, 0, 0, q)),
        ),
        compiler_params=pltpu.CompilerParams(
            dimension_semantics=("parallel", "parallel"),
            vmem_limit_bytes=48 * 1024 * 1024),   # ~3 MiB/tile used; safe on v7x 64 MiB
    )(windows, w_encT, wpack, pack_b)

    # (B, S, stride, T_pad) -> (B, S, samples); crop decoder padding + pad_input pads
    wav = jnp.transpose(out4, (0, 1, 3, 2)).reshape(B, S, T_pad * st)
    start = pad + (K - st)                        # 16 + 24 = 40
    return wav[:, :, start:start + nsample]


tdanet_forward = jax.jit(_tdanet_forward)


if __name__ == "__main__":
    key = jax.random.PRNGKey(0)
    k_wav, k_par = jax.random.split(key)
    # input wav is B x T (module asserts dim == 2)
    input_wav = jax.random.normal(k_wav, (2, 160), jnp.float32)
    params = init_params(k_par)

    out = tdanet_forward(input_wav, params)
    out = jax.block_until_ready(out)

    assert out.shape == (2, NUM_SOURCES, 160), out.shape
    assert bool(jnp.all(jnp.isfinite(out)))
    print("KERNEL_OK")
</pallas_src>

<mosaic_0001>
module attributes {stable_mosaic.version = 11 : i64} {
  func.func @_tdanet_stats_kernel(%arg0: i32, %arg1: i32, %arg2: memref<1x1x8x134xbf16, #tpu.memory_space<vmem>>, %arg3: memref<4x17x8xbf16, #tpu.memory_space<vmem>>, %arg4: memref<1x8x128xf32, #tpu.memory_space<vmem>>) attributes {dimension_semantics = [#tpu.dimension_semantics<parallel>, #tpu.dimension_semantics<arbitrary>], iteration_bounds = array<i64: 2, 1>, scalar_prefetch = 0 : i64, scratch_operands = 0 : i64, tpu.core_type = #tpu.core_type<tc>, window_params = [{transform_indices = @transform_0, window_bounds = array<i64: 1, 1, 8, 134>}, {pipeline_mode = #tpu.pipeline_mode<synchronous>, transform_indices = @transform_1, window_bounds = array<i64: 4, 17, 8>}, {transform_indices = @transform_2, window_bounds = array<i64: 1, 8, 128>}]} {
    %c0 = arith.constant 0 : index
    %c0_0 = arith.constant 0 : index
    %c0_1 = arith.constant 0 : index
    %c0_2 = arith.constant 0 : index
    %0 = vector.load %arg2[%c0, %c0_0, %c0_1, %c0_2] : memref<1x1x8x134xbf16, #tpu.memory_space<vmem>>, vector<1x1x8x134xbf16>
    %1 = vector.shape_cast %0 : vector<1x1x8x134xbf16> to vector<8x134xbf16>
    %cst = arith.constant 0.000000e+00 : f32
    %2 = vector.broadcast %cst : f32 to vector<17x131xf32>
    %c0_3 = arith.constant 0 : index
    %c0_4 = arith.constant 0 : index
    %c0_5 = arith.constant 0 : index
    %3 = vector.load %arg3[%c0_3, %c0_4, %c0_5] : memref<4x17x8xbf16, #tpu.memory_space<vmem>>, vector<1x17x8xbf16>
    %4 = vector.shape_cast %3 : vector<1x17x8xbf16> to vector<17x8xbf16>
    %5 = vector.extract_strided_slice %1 {offsets = [0, 0], sizes = [8, 131], strides = [1, 1]} : vector<8x134xbf16> to vector<8x131xbf16>
    %cst_6 = arith.constant dense<0.000000e+00> : vector<17x131xf32>
    %6 = tpu.matmul %4, %5, %cst_6 {dimension_numbers = #tpu.dot_dimension_numbers<[1], [0], [0], [1], [0, 0, 1, 1], [], []>} : vector<17x8xbf16>, vector<8x131xbf16>, vector<17x131xf32> -> vector<17x131xf32>
    %7 = arith.addf %2, %6 : vector<17x131xf32>
    %c1 = arith.constant 1 : index
    %c0_7 = arith.constant 0 : index
    %c0_8 = arith.constant 0 : index
    %8 = vector.load %arg3[%c1, %c0_7, %c0_8] : memref<4x17x8xbf16, #tpu.memory_space<vmem>>, vector<1x17x8xbf16>
    %9 = vector.shape_cast %8 : vector<1x17x8xbf16> to vector<17x8xbf16>
    %10 = vector.extract_strided_slice %1 {offsets = [0, 1], sizes = [8, 131], strides = [1, 1]} : vector<8x134xbf16> to vector<8x131xbf16>
    %cst_9 = arith.constant dense<0.000000e+00> : vector<17x131xf32>
    %11 = tpu.matmul %9, %10, %cst_9 {dimension_numbers = #tpu.dot_dimension_numbers<[1], [0], [0], [1], [0, 0, 1, 1], [], []>} : vector<17x8xbf16>, vector<8x131xbf16>, vector<17x131xf32> -> vector<17x131xf32>
    %12 = arith.addf %7, %11 : vector<17x131xf32>
    %c2 = arith.constant 2 : index
    %c0_10 = arith.constant 0 : index
    %c0_11 = arith.constant 0 : index
    %13 = vector.load %arg3[%c2, %c0_10, %c0_11] : memref<4x17x8xbf16, #tpu.memory_space<vmem>>, vector<1x17x8xbf16>
    %14 = vector.shape_cast %13 : vector<1x17x8xbf16> to vector<17x8xbf16>
    %15 = vector.extract_strided_slice %1 {offsets = [0, 2], sizes = [8, 131], strides = [1, 1]} : vector<8x134xbf16> to vector<8x131xbf16>
    %cst_12 = arith.constant dense<0.000000e+00> : vector<17x131xf32>
    %16 = tpu.matmul %14, %15, %cst_12 {dimension_numbers = #tpu.dot_dimension_numbers<[1], [0], [0], [1], [0, 0, 1, 1], [], []>} : vector<17x8xbf16>, vector<8x131xbf16>, vector<17x131xf32> -> vector<17x131xf32>
    %17 = arith.addf %12, %16 : vector<17x131xf32>
    %c3 = arith.constant 3 : index
    %c0_13 = arith.constant 0 : index
    %c0_14 = arith.constant 0 : index
    %18 = vector.load %arg3[%c3, %c0_13, %c0_14] : memref<4x17x8xbf16, #tpu.memory_space<vmem>>, vector<1x17x8xbf16>
    %19 = vector.shape_cast %18 : vector<1x17x8xbf16> to vector<17x8xbf16>
    %20 = vector.extract_strided_slice %1 {offsets = [0, 3], sizes = [8, 131], strides = [1, 1]} : vector<8x134xbf16> to vector<8x131xbf16>
    %cst_15 = arith.constant dense<0.000000e+00> : vector<17x131xf32>
    %21 = tpu.matmul %19, %20, %cst_15 {dimension_numbers = #tpu.dot_dimension_numbers<[1], [0], [0], [1], [0, 0, 1, 1], [], []>} : vector<17x8xbf16>, vector<8x131xbf16>, vector<17x131xf32> -> vector<17x131xf32>
    %22 = arith.addf %17, %21 : vector<17x131xf32>
    %23 = tpu.iota {dimensions = array<i32: 1>} : vector<17x131xi32>
    %c3_i32 = arith.constant 3 : i32
    %24 = vector.broadcast %c3_i32 : i32 to vector<17x131xi32>
    %25 = arith.cmpi sge, %23, %24 : vector<17x131xi32>
    %cst_16 = arith.constant 0.000000e+00 : f32
    %26 = vector.broadcast %cst_16 : f32 to vector<17x131xf32>
    %27 = arith.select %25, %22, %26 : vector<17x131xi1>, vector<17x131xf32>
    %c0_i32 = arith.constant 0 : i32
    %28 = arith.cmpi eq, %arg1, %c0_i32 : i32
    %29 = arith.extui %28 : i1 to i32
    %c0_i32_17 = arith.constant 0 : i32
    %30 = arith.cmpi ne, %29, %c0_i32_17 : i32
    scf.if %30 {
      %cst_29 = arith.constant 0.000000e+00 : f32
      %55 = vector.broadcast %cst_29 : f32 to vector<1x8x128xf32>
      %c0_30 = arith.constant 0 : index
      %c0_31 = arith.constant 0 : index
      %c0_32 = arith.constant 0 : index
      %56 = vector.load %arg4[%c0_30, %c0_31, %c0_32] : memref<1x8x128xf32, #tpu.memory_space<vmem>>, vector<1x8x128xf32>
      tpu.vector_store %arg4[%c0_30, %c0_31, %c0_32], %55 {strides = array<i32>} : memref<1x8x128xf32, #tpu.memory_space<vmem>>, vector<1x8x128xf32>,
    } else {
    }
    %31 = tpu.iota {dimensions = array<i32: 2>} : vector<1x8x128xi32>
    %c0_18 = arith.constant 0 : index
    %c0_19 = arith.constant 0 : index
    %c0_20 = arith.constant 0 : index
    %32 = vector.load %arg4[%c0_18, %c0_19, %c0_20] : memref<1x8x128xf32, #tpu.memory_space<vmem>>, vector<1x8x128xf32>
    %c0_i32_21 = arith.constant 0 : i32
    %33 = vector.broadcast %c0_i32_21 : i32 to vector<1x8x128xi32>
    %34 = arith.cmpi eq, %31, %33 : vector<1x8x128xi32>
    %35 = vector.shape_cast %27 : vector<17x131xf32> to vector<1x17x131xf32>
    %cst_22 = arith.constant dense<0.000000e+00> : vector<1xf32>
    %36 = vector.multi_reduction <add>, %35, %cst_22 [1, 2] : vector<1x17x131xf32> to vector<1xf32>
    %37 = vector.shape_cast %36 : vector<1xf32> to vector<1x1x1xf32>
    %38 = vector.extract %37[0, 0, 0] : f32 from vector<1x1x1xf32>
    %cst_23 = arith.constant 0.000000e+00 : f32
    %39 = vector.broadcast %38 : f32 to vector<1x8x128xf32>
    %40 = vector.broadcast %cst_23 : f32 to vector<1x8x128xf32>
    %41 = arith.select %34, %39, %40 : vector<1x8x128xi1>, vector<1x8x128xf32>
    %c1_i32 = arith.constant 1 : i32
    %42 = vector.broadcast %c1_i32 : i32 to vector<1x8x128xi32>
    %43 = arith.cmpi eq, %31, %42 : vector<1x8x128xi32>
    %44 = arith.mulf %27, %27 : vector<17x131xf32>
    %45 = vector.shape_cast %44 : vector<17x131xf32> to vector<1x17x131xf32>
    %cst_24 = arith.constant dense<0.000000e+00> : vector<1xf32>
    %46 = vector.multi_reduction <add>, %45, %cst_24 [1, 2] : vector<1x17x131xf32> to vector<1xf32>
    %47 = vector.shape_cast %46 : vector<1xf32> to vector<1x1x1xf32>
    %48 = vector.extract %47[0, 0, 0] : f32 from vector<1x1x1xf32>
    %cst_25 = arith.constant 0.000000e+00 : f32
    %49 = vector.broadcast %48 : f32 to vector<1x8x128xf32>
    %50 = vector.broadcast %cst_25 : f32 to vector<1x8x128xf32>
    %51 = arith.select %43, %49, %50 : vector<1x8x128xi1>, vector<1x8x128xf32>
    %52 = arith.addf %41, %51 : vector<1x8x128xf32>
    %53 = arith.addf %32, %52 : vector<1x8x128xf32>
    %c0_26 = arith.constant 0 : index
    %c0_27 = arith.constant 0 : index
    %c0_28 = arith.constant 0 : index
    %54 = vector.load %arg4[%c0_26, %c0_27, %c0_28] : memref<1x8x128xf32, #tpu.memory_space<vmem>>, vector<1x8x128xf32>
    tpu.vector_store %arg4[%c0_26, %c0_27, %c0_28], %53 {strides = array<i32>} : memref<1x8x128xf32, #tpu.memory_space<vmem>>, vector<1x8x128xf32>,
    return
  }
  func.func @transform_0(%arg0: i32, %arg1: i32) -> (i32, i32, i32, i32) {
    %c0_i32 = arith.constant 0 : i32
    %c0_i32_0 = arith.constant 0 : i32
    %c0_i32_1 = arith.constant 0 : i32
    return %arg0, %arg1, %c0_i32, %c0_i32_0 : i32, i32, i32, i32
  }
  func.func @transform_1(%arg0: i32, %arg1: i32) -> (i32, i32, i32) {
    %c0_i32 = arith.constant 0 : i32
    %c0_i32_0 = arith.constant 0 : i32
    %c0_i32_1 = arith.constant 0 : i32
    %c0_i32_2 = arith.constant 0 : i32
    return %c0_i32, %c0_i32_0, %c0_i32_1 : i32, i32, i32
  }
  func.func @transform_2(%arg0: i32, %arg1: i32) -> (i32, i32, i32) {
    %c0_i32 = arith.constant 0 : i32
    %c0_i32_0 = arith.constant 0 : i32
    %c0_i32_1 = arith.constant 0 : i32
    return %arg0, %c0_i32, %c0_i32_0 : i32, i32, i32
  }
}

module attributes {stable_mosaic.version = 11 : i64} {
  func.func @_tdanet_main_kernel(%arg0: i32, %arg1: i32, %arg2: memref<1x1x8x134xbf16, #tpu.memory_space<vmem>>, %arg3: memref<4x17x8xbf16, #tpu.memory_space<vmem>>, %arg4: memref<192x17xf32, #tpu.memory_space<vmem>>, %arg5: memref<1x24x8xf32, #tpu.memory_space<vmem>>, %arg6: memref<1x2x8x128xf32, #tpu.memory_space<vmem>>) attributes {dimension_semantics = [#tpu.dimension_semantics<parallel>, #tpu.dimension_semantics<parallel>], iteration_bounds = array<i64: 2, 1>, scalar_prefetch = 0 : i64, scratch_operands = 0 : i64, tpu.core_type = #tpu.core_type<tc>, window_params = [{transform_indices = @transform_0, window_bounds = array<i64: 1, 1, 8, 134>}, {pipeline_mode = #tpu.pipeline_mode<synchronous>, transform_indices = @transform_1, window_bounds = array<i64: 4, 17, 8>}, {pipeline_mode = #tpu.pipeline_mode<synchronous>, transform_indices = @transform_2, window_bounds = array<i64: 192, 17>}, {transform_indices = @transform_3, window_bounds = array<i64: 1, 24, 8>}, {transform_indices = @transform_4, window_bounds = array<i64: 1, 2, 8, 128>}]} {
    %c0 = arith.constant 0 : index
    %c0_0 = arith.constant 0 : index
    %c0_1 = arith.constant 0 : index
    %c0_2 = arith.constant 0 : index
    %0 = vector.load %arg2[%c0, %c0_0, %c0_1, %c0_2] : memref<1x1x8x134xbf16, #tpu.memory_space<vmem>>, vector<1x1x8x134xbf16>
    %1 = vector.shape_cast %0 : vector<1x1x8x134xbf16> to vector<8x134xbf16>
    %cst = arith.constant 0.000000e+00 : f32
    %2 = vector.broadcast %cst : f32 to vector<17x131xf32>
    %c0_3 = arith.constant 0 : index
    %c0_4 = arith.constant 0 : index
    %c0_5 = arith.constant 0 : index
    %3 = vector.load %arg3[%c0_3, %c0_4, %c0_5] : memref<4x17x8xbf16, #tpu.memory_space<vmem>>, vector<1x17x8xbf16>
    %4 = vector.shape_cast %3 : vector<1x17x8xbf16> to vector<17x8xbf16>
    %5 = vector.extract_strided_slice %1 {offsets = [0, 0], sizes = [8, 131], strides = [1, 1]} : vector<8x134xbf16> to vector<8x131xbf16>
    %cst_6 = arith.constant dense<0.000000e+00> : vector<17x131xf32>
    %6 = tpu.matmul %4, %5, %cst_6 {dimension_numbers = #tpu.dot_dimension_numbers<[1], [0], [0], [1], [0, 0, 1, 1], [], []>} : vector<17x8xbf16>, vector<8x131xbf16>, vector<17x131xf32> -> vector<17x131xf32>
    %7 = arith.addf %2, %6 : vector<17x131xf32>
    %c1 = arith.constant 1 : index
    %c0_7 = arith.constant 0 : index
    %c0_8 = arith.constant 0 : index
    %8 = vector.load %arg3[%c1, %c0_7, %c0_8] : memref<4x17x8xbf16, #tpu.memory_space<vmem>>, vector<1x17x8xbf16>
    %9 = vector.shape_cast %8 : vector<1x17x8xbf16> to vector<17x8xbf16>
    %10 = vector.extract_strided_slice %1 {offsets = [0, 1], sizes = [8, 131], strides = [1, 1]} : vector<8x134xbf16> to vector<8x131xbf16>
    %cst_9 = arith.constant dense<0.000000e+00> : vector<17x131xf32>
    %11 = tpu.matmul %9, %10, %cst_9 {dimension_numbers = #tpu.dot_dimension_numbers<[1], [0], [0], [1], [0, 0, 1, 1], [], []>} : vector<17x8xbf16>, vector<8x131xbf16>, vector<17x131xf32> -> vector<17x131xf32>
    %12 = arith.addf %7, %11 : vector<17x131xf32>
    %c2 = arith.constant 2 : index
    %c0_10 = arith.constant 0 : index
    %c0_11 = arith.constant 0 : index
    %13 = vector.load %arg3[%c2, %c0_10, %c0_11] : memref<4x17x8xbf16, #tpu.memory_space<vmem>>, vector<1x17x8xbf16>
    %14 = vector.shape_cast %13 : vector<1x17x8xbf16> to vector<17x8xbf16>
    %15 = vector.extract_strided_slice %1 {offsets = [0, 2], sizes = [8, 131], strides = [1, 1]} : vector<8x134xbf16> to vector<8x131xbf16>
    %cst_12 = arith.constant dense<0.000000e+00> : vector<17x131xf32>
    %16 = tpu.matmul %14, %15, %cst_12 {dimension_numbers = #tpu.dot_dimension_numbers<[1], [0], [0], [1], [0, 0, 1, 1], [], []>} : vector<17x8xbf16>, vector<8x131xbf16>, vector<17x131xf32> -> vector<17x131xf32>
    %17 = arith.addf %12, %16 : vector<17x131xf32>
    %c3 = arith.constant 3 : index
    %c0_13 = arith.constant 0 : index
    %c0_14 = arith.constant 0 : index
    %18 = vector.load %arg3[%c3, %c0_13, %c0_14] : memref<4x17x8xbf16, #tpu.memory_space<vmem>>, vector<1x17x8xbf16>
    %19 = vector.shape_cast %18 : vector<1x17x8xbf16> to vector<17x8xbf16>
    %20 = vector.extract_strided_slice %1 {offsets = [0, 3], sizes = [8, 131], strides = [1, 1]} : vector<8x134xbf16> to vector<8x131xbf16>
    %cst_15 = arith.constant dense<0.000000e+00> : vector<17x131xf32>
    %21 = tpu.matmul %19, %20, %cst_15 {dimension_numbers = #tpu.dot_dimension_numbers<[1], [0], [0], [1], [0, 0, 1, 1], [], []>} : vector<17x8xbf16>, vector<8x131xbf16>, vector<17x131xf32> -> vector<17x131xf32>
    %22 = arith.addf %17, %21 : vector<17x131xf32>
    %c0_16 = arith.constant 0 : index
    %c0_17 = arith.constant 0 : index
    %c0_18 = arith.constant 0 : index
    %23 = vector.load %arg5[%c0_16, %c0_17, %c0_18] : memref<1x24x8xf32, #tpu.memory_space<vmem>>, vector<1x24x8xf32>
    %24 = vector.shape_cast %23 : vector<1x24x8xf32> to vector<24x8xf32>
    %25 = vector.extract_strided_slice %24 {offsets = [0, 0], sizes = [17, 1], strides = [1, 1]} : vector<24x8xf32> to vector<17x1xf32>
    %26 = vector.extract_strided_slice %24 {offsets = [0, 1], sizes = [17, 1], strides = [1, 1]} : vector<24x8xf32> to vector<17x1xf32>
    %27 = vector.extract_strided_slice %24 {offsets = [0, 2], sizes = [16, 1], strides = [1, 1]} : vector<24x8xf32> to vector<16x1xf32>
    %28 = vector.extract_strided_slice %24 {offsets = [0, 3], sizes = [16, 1], strides = [1, 1]} : vector<24x8xf32> to vector<16x1xf32>
    %29 = vector.extract_strided_slice %24 {offsets = [0, 4], sizes = [16, 1], strides = [1, 1]} : vector<24x8xf32> to vector<16x1xf32>
    %30 = vector.extract_strided_slice %24 {offsets = [0, 5], sizes = [17, 1], strides = [1, 1]} : vector<24x8xf32> to vector<17x1xf32>
    %31 = vector.extract_strided_slice %24 {offsets = [0, 7], sizes = [17, 1], strides = [1, 1]} : vector<24x8xf32> to vector<17x1xf32>
    %32 = vector.extract_strided_slice %24 {offsets = [0, 6], sizes = [1, 1], strides = [1, 1]} : vector<24x8xf32> to vector<1x1xf32>
    %33 = vector.extract_strided_slice %24 {offsets = [1, 6], sizes = [1, 1], strides = [1, 1]} : vector<24x8xf32> to vector<1x1xf32>
    %34 = vector.extract_strided_slice %24 {offsets = [2, 6], sizes = [1, 1], strides = [1, 1]} : vector<24x8xf32> to vector<1x1xf32>
    %35 = vector.extract_strided_slice %24 {offsets = [3, 6], sizes = [1, 1], strides = [1, 1]} : vector<24x8xf32> to vector<1x1xf32>
    %36 = vector.broadcast %34 : vector<1x1xf32> to vector<17x131xf32>
    %37 = arith.subf %22, %36 : vector<17x131xf32>
    %38 = vector.broadcast %35 : vector<1x1xf32> to vector<17x131xf32>
    %39 = arith.mulf %37, %38 : vector<17x131xf32>
    %40 = vector.broadcast %25 : vector<17x1xf32> to vector<17x131xf32>
    %41 = arith.mulf %39, %40 : vector<17x131xf32>
    %42 = vector.broadcast %26 : vector<17x1xf32> to vector<17x131xf32>
    %43 = arith.addf %41, %42 : vector<17x131xf32>
    %c0_19 = arith.constant 0 : index
    %c0_20 = arith.constant 0 : index
    %44 = vector.load %arg4[%c0_19, %c0_20] : memref<192x17xf32, #tpu.memory_space<vmem>>, vector<16x17xf32>
    %cst_21 = arith.constant dense<0.000000e+00> : vector<16x131xf32>
    %45 = tpu.matmul %44, %43, %cst_21 {dimension_numbers = #tpu.dot_dimension_numbers<[1], [0], [0], [1], [0, 0, 1, 1], [], []>} : vector<16x17xf32>, vector<17x131xf32>, vector<16x131xf32> -> vector<16x131xf32>
    %46 = vector.broadcast %27 : vector<16x1xf32> to vector<16x131xf32>
    %47 = arith.addf %45, %46 : vector<16x131xf32>
    %48 = arith.addf %47, %47 : vector<16x131xf32>
    %49 = vector.broadcast %28 : vector<16x1xf32> to vector<16x131xf32>
    %50 = arith.mulf %48, %49 : vector<16x131xf32>
    %51 = vector.broadcast %29 : vector<16x1xf32> to vector<16x131xf32>
    %52 = arith.addf %50, %51 : vector<16x131xf32>
    %cst_22 = arith.constant 0.000000e+00 : f32
    %53 = vector.broadcast %cst_22 : f32 to vector<16x131xf32>
    %54 = arith.cmpf oge, %52, %53 : vector<16x131xf32>
    %55 = vector.broadcast %32 : vector<1x1xf32> to vector<16x131xf32>
    %56 = arith.mulf %55, %52 : vector<16x131xf32>
    %57 = arith.select %54, %52, %56 : vector<16x131xi1>, vector<16x131xf32>
    %cst_23 = arith.constant 0.000000e+00 : f32
    %58 = vector.broadcast %cst_23 : f32 to vector<16x131xf32>
    %59 = arith.cmpf oge, %57, %58 : vector<16x131xf32>
    %60 = vector.broadcast %33 : vector<1x1xf32> to vector<16x131xf32>
    %61 = arith.mulf %60, %57 : vector<16x131xf32>
    %62 = arith.select %59, %57, %61 : vector<16x131xi1>, vector<16x131xf32>
    %c16 = arith.constant 16 : index
    %c0_24 = arith.constant 0 : index
    %63 = vector.load %arg4[%c16, %c0_24] : memref<192x17xf32, #tpu.memory_space<vmem>>, vector<17x16xf32>
    %cst_25 = arith.constant dense<0.000000e+00> : vector<17x131xf32>
    %64 = tpu.matmul %63, %62, %cst_25 {dimension_numbers = #tpu.dot_dimension_numbers<[1], [0], [0], [1], [0, 0, 1, 1], [], []>} : vector<17x16xf32>, vector<16x131xf32>, vector<17x131xf32> -> vector<17x131xf32>
    %65 = vector.broadcast %30 : vector<17x1xf32> to vector<17x131xf32>
    %66 = arith.addf %64, %65 : vector<17x131xf32>
    %c40 = arith.constant 40 : index
    %c0_26 = arith.constant 0 : index
    %67 = vector.load %arg4[%c40, %c0_26] : memref<192x17xf32, #tpu.memory_space<vmem>>, vector<17x16xf32>
    %cst_27 = arith.constant dense<0.000000e+00> : vector<17x131xf32>
    %68 = tpu.matmul %67, %62, %cst_27 {dimension_numbers = #tpu.dot_dimension_numbers<[1], [0], [0], [1], [0, 0, 1, 1], [], []>} : vector<17x16xf32>, vector<16x131xf32>, vector<17x131xf32> -> vector<17x131xf32>
    %69 = vector.broadcast %31 : vector<17x1xf32> to vector<17x131xf32>
    %70 = arith.addf %68, %69 : vector<17x131xf32>
    %cst_28 = arith.constant 0.000000e+00 : f32
    %71 = vector.broadcast %cst_28 : f32 to vector<17x131xf32>
    %72 = arith.maximumf %66, %71 : vector<17x131xf32>
    %73 = arith.mulf %72, %22 : vector<17x131xf32>
    %cst_29 = arith.constant 0.000000e+00 : f32
    %74 = vector.broadcast %cst_29 : f32 to vector<17x131xf32>
    %75 = arith.maximumf %70, %74 : vector<17x131xf32>
    %76 = arith.mulf %75, %22 : vector<17x131xf32>
    %cst_30 = arith.constant 0.000000e+00 : f32
    %77 = vector.broadcast %cst_30 : f32 to vector<16x128xf32>
    %c64 = arith.constant 64 : index
    %c0_31 = arith.constant 0 : index
    %78 = vector.load %arg4[%c64, %c0_31] : memref<192x17xf32, #tpu.memory_space<vmem>>, vector<16x17xf32>
    %c128 = arith.constant 128 : index
    %c0_32 = arith.constant 0 : index
    %79 = vector.load %arg4[%c128, %c0_32] : memref<192x17xf32, #tpu.memory_space<vmem>>, vector<16x17xf32>
    %80 = vector.extract_strided_slice %73 {offsets = [0, 0], sizes = [17, 128], strides = [1, 1]} : vector<17x131xf32> to vector<17x128xf32>
    %cst_33 = arith.constant dense<0.000000e+00> : vector<16x128xf32>
    %81 = tpu.matmul %78, %80, %cst_33 {dimension_numbers = #tpu.dot_dimension_numbers<[1], [0], [0], [1], [0, 0, 1, 1], [], []>} : vector<16x17xf32>, vector<17x128xf32>, vector<16x128xf32> -> vector<16x128xf32>
    %82 = arith.addf %77, %81 : vector<16x128xf32>
    %83 = vector.extract_strided_slice %76 {offsets = [0, 0], sizes = [17, 128], strides = [1, 1]} : vector<17x131xf32> to vector<17x128xf32>
    %cst_34 = arith.constant dense<0.000000e+00> : vector<16x128xf32>
    %84 = tpu.matmul %79, %83, %cst_34 {dimension_numbers = #tpu.dot_dimension_numbers<[1], [0], [0], [1], [0, 0, 1, 1], [], []>} : vector<16x17xf32>, vector<17x128xf32>, vector<16x128xf32> -> vector<16x128xf32>
    %85 = arith.addf %82, %84 : vector<16x128xf32>
    %c80 = arith.constant 80 : index
    %c0_35 = arith.constant 0 : index
    %86 = vector.load %arg4[%c80, %c0_35] : memref<192x17xf32, #tpu.memory_space<vmem>>, vector<16x17xf32>
    %c144 = arith.constant 144 : index
    %c0_36 = arith.constant 0 : index
    %87 = vector.load %arg4[%c144, %c0_36] : memref<192x17xf32, #tpu.memory_space<vmem>>, vector<16x17xf32>
    %88 = vector.extract_strided_slice %73 {offsets = [0, 1], sizes = [17, 128], strides = [1, 1]} : vector<17x131xf32> to vector<17x128xf32>
    %cst_37 = arith.constant dense<0.000000e+00> : vector<16x128xf32>
    %89 = tpu.matmul %86, %88, %cst_37 {dimension_numbers = #tpu.dot_dimension_numbers<[1], [0], [0], [1], [0, 0, 1, 1], [], []>} : vector<16x17xf32>, vector<17x128xf32>, vector<16x128xf32> -> vector<16x128xf32>
    %90 = arith.addf %85, %89 : vector<16x128xf32>
    %91 = vector.extract_strided_slice %76 {offsets = [0, 1], sizes = [17, 128], strides = [1, 1]} : vector<17x131xf32> to vector<17x128xf32>
    %cst_38 = arith.constant dense<0.000000e+00> : vector<16x128xf32>
    %92 = tpu.matmul %87, %91, %cst_38 {dimension_numbers = #tpu.dot_dimension_numbers<[1], [0], [0], [1], [0, 0, 1, 1], [], []>} : vector<16x17xf32>, vector<17x128xf32>, vector<16x128xf32> -> vector<16x128xf32>
    %93 = arith.addf %90, %92 : vector<16x128xf32>
    %c96 = arith.constant 96 : index
    %c0_39 = arith.constant 0 : index
    %94 = vector.load %arg4[%c96, %c0_39] : memref<192x17xf32, #tpu.memory_space<vmem>>, vector<16x17xf32>
    %c160 = arith.constant 160 : index
    %c0_40 = arith.constant 0 : index
    %95 = vector.load %arg4[%c160, %c0_40] : memref<192x17xf32, #tpu.memory_space<vmem>>, vector<16x17xf32>
    %96 = vector.extract_strided_slice %73 {offsets = [0, 2], sizes = [17, 128], strides = [1, 1]} : vector<17x131xf32> to vector<17x128xf32>
    %cst_41 = arith.constant dense<0.000000e+00> : vector<16x128xf32>
    %97 = tpu.matmul %94, %96, %cst_41 {dimension_numbers = #tpu.dot_dimension_numbers<[1], [0], [0], [1], [0, 0, 1, 1], [], []>} : vector<16x17xf32>, vector<17x128xf32>, vector<16x128xf32> -> vector<16x128xf32>
    %98 = arith.addf %93, %97 : vector<16x128xf32>
    %99 = vector.extract_strided_slice %76 {offsets = [0, 2], sizes = [17, 128], strides = [1, 1]} : vector<17x131xf32> to vector<17x128xf32>
    %cst_42 = arith.constant dense<0.000000e+00> : vector<16x128xf32>
    %100 = tpu.matmul %95, %99, %cst_42 {dimension_numbers = #tpu.dot_dimension_numbers<[1], [0], [0], [1], [0, 0, 1, 1], [], []>} : vector<16x17xf32>, vector<17x128xf32>, vector<16x128xf32> -> vector<16x128xf32>
    %101 = arith.addf %98, %100 : vector<16x128xf32>
    %c112 = arith.constant 112 : index
    %c0_43 = arith.constant 0 : index
    %102 = vector.load %arg4[%c112, %c0_43] : memref<192x17xf32, #tpu.memory_space<vmem>>, vector<16x17xf32>
    %c176 = arith.constant 176 : index
    %c0_44 = arith.constant 0 : index
    %103 = vector.load %arg4[%c176, %c0_44] : memref<192x17xf32, #tpu.memory_space<vmem>>, vector<16x17xf32>
    %104 = vector.extract_strided_slice %73 {offsets = [0, 3], sizes = [17, 128], strides = [1, 1]} : vector<17x131xf32> to vector<17x128xf32>
    %cst_45 = arith.constant dense<0.000000e+00> : vector<16x128xf32>
    %105 = tpu.matmul %102, %104, %cst_45 {dimension_numbers = #tpu.dot_dimension_numbers<[1], [0], [0], [1], [0, 0, 1, 1], [], []>} : vector<16x17xf32>, vector<17x128xf32>, vector<16x128xf32> -> vector<16x128xf32>
    %106 = arith.addf %101, %105 : vector<16x128xf32>
    %107 = vector.extract_strided_slice %76 {offsets = [0, 3], sizes = [17, 128], strides = [1, 1]} : vector<17x131xf32> to vector<17x128xf32>
    %cst_46 = arith.constant dense<0.000000e+00> : vector<16x128xf32>
    %108 = tpu.matmul %103, %107, %cst_46 {dimension_numbers = #tpu.dot_dimension_numbers<[1], [0], [0], [1], [0, 0, 1, 1], [], []>} : vector<16x17xf32>, vector<17x128xf32>, vector<16x128xf32> -> vector<16x128xf32>
    %109 = arith.addf %106, %108 : vector<16x128xf32>
    %110 = vector.extract_strided_slice %109 {offsets = [0, 0], sizes = [8, 128], strides = [1, 1]} : vector<16x128xf32> to vector<8x128xf32>
    %c0_47 = arith.constant 0 : index
    %c0_48 = arith.constant 0 : index
    %c0_49 = arith.constant 0 : index
    %c0_50 = arith.constant 0 : index
    %111 = vector.load %arg6[%c0_47, %c0_48, %c0_49, %c0_50] : memref<1x2x8x128xf32, #tpu.memory_space<vmem>>, vector<1x1x8x128xf32>
    %112 = vector.shape_cast %111 : vector<1x1x8x128xf32> to vector<8x128xf32>
    %113 = vector.shape_cast %110 : vector<8x128xf32> to vector<1x1x8x128xf32>
    tpu.vector_store %arg6[%c0_47, %c0_48, %c0_49, %c0_50], %113 {strides = array<i32>} : memref<1x2x8x128xf32, #tpu.memory_space<vmem>>, vector<1x1x8x128xf32>,
    %114 = vector.extract_strided_slice %109 {offsets = [8, 0], sizes = [8, 128], strides = [1, 1]} : vector<16x128xf32> to vector<8x128xf32>
    %c0_51 = arith.constant 0 : index
    %c1_52 = arith.constant 1 : index
    %c0_53 = arith.constant 0 : index
    %c0_54 = arith.constant 0 : index
    %115 = vector.load %arg6[%c0_51, %c1_52, %c0_53, %c0_54] : memref<1x2x8x128xf32, #tpu.memory_space<vmem>>, vector<1x1x8x128xf32>
    %116 = vector.shape_cast %115 : vector<1x1x8x128xf32> to vector<8x128xf32>
    %117 = vector.shape_cast %114 : vector<8x128xf32> to vector<1x1x8x128xf32>
    tpu.vector_store %arg6[%c0_51, %c1_52, %c0_53, %c0_54], %117 {strides = array<i32>} : memref<1x2x8x128xf32, #tpu.memory_space<vmem>>, vector<1x1x8x128xf32>,
    return
  }
  func.func @transform_0(%arg0: i32, %arg1: i32) -> (i32, i32, i32, i32) {
    %c0_i32 = arith.constant 0 : i32
    %c0_i32_0 = arith.constant 0 : i32
    %c0_i32_1 = arith.constant 0 : i32
    return %arg0, %arg1, %c0_i32, %c0_i32_0 : i32, i32, i32, i32
  }
  func.func @transform_1(%arg0: i32, %arg1: i32) -> (i32, i32, i32) {
    %c0_i32 = arith.constant 0 : i32
    %c0_i32_0 = arith.constant 0 : i32
    %c0_i32_1 = arith.constant 0 : i32
    %c0_i32_2 = arith.constant 0 : i32
    return %c0_i32, %c0_i32_0, %c0_i32_1 : i32, i32, i32
  }
  func.func @transform_2(%arg0: i32, %arg1: i32) -> (i32, i32) {
    %c0_i32 = arith.constant 0 : i32
    %c0_i32_0 = arith.constant 0 : i32
    %c0_i32_1 = arith.constant 0 : i32
    return %c0_i32, %c0_i32_0 : i32, i32
  }
  func.func @transform_3(%arg0: i32, %arg1: i32) -> (i32, i32, i32) {
    %c0_i32 = arith.constant 0 : i32
    %c0_i32_0 = arith.constant 0 : i32
    %c0_i32_1 = arith.constant 0 : i32
    return %arg0, %c0_i32, %c0_i32_0 : i32, i32, i32
  }
  func.func @transform_4(%arg0: i32, %arg1: i32) -> (i32, i32, i32, i32) {
    %c0_i32 = arith.constant 0 : i32
    %c0_i32_0 = arith.constant 0 : i32
    %c0_i32_1 = arith.constant 0 : i32
    return %arg0, %c0_i32, %c0_i32_0, %arg1 : i32, i32, i32, i32
  }
}

</mosaic_0001>

<llo_original>
// kernel: _tdanet_forward.2
$region0: #{_tdanet_forward.2}
  #allocation0 [shape = 'u32[]', space=smem, size = 0x4, offset = 0x4, fixed_abs, tag = 'smem constant byte address 0x4 - core index']
  #allocation1 [shape = 'u32[72,128]{1,0:T(1,128)}', space=vmem, size = 0x9000, scoped, tag = 'internal scratch']
  %s0 = inlined_call_operand.vmem [shape: bf16[2,1,8,134], index: 0, kind: input, shape index: {}]
  %s1 = inlined_call_operand.vmem [shape: bf16[4,17,8], index: 1, kind: input, shape index: {}]
  %s2 = inlined_call_operand.vmem [shape: f32[2,8,128], index: 2, kind: output, shape index: {}]
  %s3 = sld [smem:[#allocation0]]
  $region45: #{_tdanet_forward.2} parent=0
    _
  %s5 = ssub.s32 1, %s3
  %s6 = scalar_select 0, %s5, %s3
  loop: start=0, step=1, limit=4
  $region2: #{_tdanet_forward.2} parent=0 // loop_pre_header
    _
  $region3: #{_tdanet_forward.2} parent=0 // loop_header
    %s8 = sphi 0, %s12
    %p9 = scmp.ge.s32.totalorder %s8, 4
    %s15 = sphi 0, %s27
    %s16 = sphi 0, %s23
    %s17 = sphi 0, %s15
    %s18 = sphi 0, %s16
    %s19 = sphi 0, %s17
    %s20 = sphi 0, %s18
    %s32 = sphi 0, %s34
    %s35 = sphi 0, %s32
    %s36 = sphi 0, %s35
    %s52 = sphi 0, %s36
    %s56 = sphi 0, %s56
    %s58 = sphi 0, %s56
    %s59 = sphi 0, %s58
    %s73 = sphi 0, %s59
    %s79 = sphi 0, %s81
    %s82 = sphi 0, %s79
    %s83 = sphi 0, %s82
    %s99 = sphi 0, %s83
  $region4: #{_tdanet_forward.2} parent=0 // loop_header_branch
    %11 = sbr.rel (%p9) target = $region8
  $region5: #{_tdanet_forward.2} parent=0 // loop_body
    %s13 = ssub.s32 %s8, 1
    %s14 = ssub.s32 %s8, 2
    %s21 = sadd.s32 1, %s16
    %p22 = scmp.ge.s32.totalorder %s21, 1
    %s23 = scalar_select %p22, 0, %s21
    %s24 = sadd.s32 1, %s15
    %s25 = scalar_select %p22, %s24, %s15
    %p26 = scmp.ge.s32.totalorder %s25, 2
    %s27 = scalar_select %p26, 0, %s25
    %s28 = ssub.s32 %s15, %s27
    %s29 = ssub.s32 %s16, %s23
    %s30 = sor.u32 %s28, %s29
    %p31 = scmp.eq.s32.totalorder %s30, 0
    %s33 = sadd.s32 %s32, 1
    %s34 = scalar_select %p31, %s32, %s33
    %p37 = pneg %p31
    %p38 = scmp.eq.s32.totalorder %s8, 1
    %p39 = por %p37, %p38
    %p40 = scmp.ne.s32.totalorder %s32, %s35
    %p41 = scmp.eq.s32.totalorder %s8, 0
    %p42 = por %p40, %p41
    %p43 = scmp.ne.s32.totalorder %s32, %s35
    %p44 = scmp.eq.s32.totalorder %s13, 1
    %p45 = por %p43, %p44
    %p46 = scmp.ne.s32.totalorder %s35, %s36
    %p47 = scmp.eq.s32.totalorder %s13, 0
    %p48 = por %p46, %p47
    %p49 = scmp.ne.s32.totalorder %s35, %s36
    %p50 = scmp.eq.s32.totalorder %s14, 1
    %p51 = por %p49, %p50
    %p53 = scmp.ne.s32.totalorder %s36, %s52
    %p54 = scmp.eq.s32.totalorder %s14, 0
    %p55 = por %p53, %p54
    %s57 = sadd.s32 %s56, 1
    %p60 = scmp.eq.s32.totalorder %s8, 1
    %p61 = scmp.ne.s32.totalorder %s56, %s58
    %p62 = scmp.eq.s32.totalorder %s8, 0
    %p63 = por %p61, %p62
    %p64 = scmp.ne.s32.totalorder %s56, %s58
    %p65 = scmp.eq.s32.totalorder %s13, 1
    %p66 = por %p64, %p65
    %p67 = scmp.ne.s32.totalorder %s58, %s59
    %p68 = scmp.eq.s32.totalorder %s13, 0
    %p69 = por %p67, %p68
    %p70 = scmp.ne.s32.totalorder %s58, %s59
    %p71 = scmp.eq.s32.totalorder %s14, 1
    %p72 = por %p70, %p71
    %p74 = scmp.ne.s32.totalorder %s59, %s73
    %p75 = scmp.eq.s32.totalorder %s14, 0
    %p76 = por %p74, %p75
    %s77 = ssub.s32 %s15, %s27
    %p78 = scmp.eq.s32.totalorder %s77, 0
    %s80 = sadd.s32 %s79, 1
    %s81 = scalar_select %p78, %s79, %s80
    %p84 = pneg %p78
    %p85 = scmp.eq.s32.totalorder %s8, 1
    %p86 = por %p84, %p85
    %p87 = scmp.ne.s32.totalorder %s79, %s82
    %p88 = scmp.eq.s32.totalorder %s8, 0
    %p89 = por %p87, %p88
    %p90 = scmp.ne.s32.totalorder %s79, %s82
    %p91 = scmp.eq.s32.totalorder %s13, 1
    %p92 = por %p90, %p91
    %p93 = scmp.ne.s32.totalorder %s82, %s83
    %p94 = scmp.eq.s32.totalorder %s13, 0
    %p95 = por %p93, %p94
    %p96 = scmp.ne.s32.totalorder %s82, %s83
    %p97 = scmp.eq.s32.totalorder %s14, 1
    %p98 = por %p96, %p97
    %p100 = scmp.ne.s32.totalorder %s83, %s99
    %p101 = scmp.eq.s32.totalorder %s14, 0
    %p102 = por %p100, %p101
    %p103 = scmp.le.s32.totalorder 1, %s8
    %p104 = scmp.lt.s32.totalorder %s8, 3
    %p105 = pnand %p103, %p104
    %p106 = pneg %p105
    // Predicated region
    $region9: #{_tdanet_forward.2} parent=5 // pred_check
      _
    $region10: #{_tdanet_forward.2} parent=5 // pred_check_branch
      %108 = sbr.rel (%p105) target = $region12
    $region11: #{_tdanet_forward.2} parent=5 // pred_region
      %s109 = ssub.s32 %s8, 1
      // Predicated region
      $region13: #{_tdanet_forward.2} parent=11 // pred_check
        %p110 = pneg %p69
      $region14: #{_tdanet_forward.2} parent=11 // pred_check_branch
        %112 = sbr.rel (%p110) target = $region16
      $region15: #{_tdanet_forward.2} parent=11 // pred_region
        _
      $region16: #{_tdanet_forward.2} parent=11 // pred_fallthru
        _
    $region12: #{_tdanet_forward.2} parent=5 // pred_fallthru
      _
    %p113 = scmp.lt.s32.totalorder %s8, 2
    // Predicated region
    $region17: #{_tdanet_forward.2} parent=5 // pred_check
      %p114 = pneg %p113
    $region18: #{_tdanet_forward.2} parent=5 // pred_check_branch
      %116 = sbr.rel (%p114) target = $region20
    $region19: #{_tdanet_forward.2} parent=5 // pred_region
      // Predicated region
      $region21: #{_tdanet_forward.2} parent=19 // pred_check
        %p117 = pneg %p42
      $region22: #{_tdanet_forward.2} parent=19 // pred_check_branch
        %119 = sbr.rel (%p117) target = $region24
      $region23: #{_tdanet_forward.2} parent=19 // pred_region
        %p120 = scmp.lt.s32.totalorder %s15, 1
        %s121 = scalar_select %p120, %s15, 1
        %p122 = scmp.lt.s32.totalorder %s16, 0
        %s123 = scalar_select %p122, %s16, 0
        %s124 = smul.addr %s123, 2
        %s125 = smul.addr %s121, 2
        %s126 = sadd.s32 %s124, %s125
        %s127 = smul.addr %s126, 4
        %s128 = scalar_lea.vmem %s0, %s127
      $region24: #{_tdanet_forward.2} parent=19 // pred_fallthru
        _
    $region20: #{_tdanet_forward.2} parent=5 // pred_fallthru
      _
    %p129 = scmp.le.s32.totalorder 1, %s8
    %p130 = scmp.lt.s32.totalorder %s8, 3
    %p131 = pnand %p129, %p130
    %p132 = pneg %p131
    // Predicated region
    $region25: #{_tdanet_forward.2} parent=5 // pred_check
      _
    $region26: #{_tdanet_forward.2} parent=5 // pred_check_branch
      %134 = sbr.rel (%p131) target = $region28
    $region27: #{_tdanet_forward.2} parent=5 // pred_region
      %s135 = ssub.s32 %s8, 1
      %p136 = scmp.lt.s32.totalorder %s17, 1
      %s137 = scalar_select %p136, %s17, 1
      %p138 = scmp.lt.s32.totalorder %s18, 0
      %s139 = scalar_select %p138, %s18, 0
      %s140 = smul.addr %s139, 2
      %s141 = smul.addr %s137, 2
      %s142 = sadd.s32 %s140, %s141
      %s143 = smul.addr %s142, 4
      %s144 = scalar_lea.vmem %s0, %s143
      %p145 = pneg %p48
      %p146 = pneg %p45
      %p147 = pneg %p69
      %p148 = pneg %p66
      %p149 = pneg %p95
      %p150 = pneg %p92
      %p151 = scmp.lt.s32.totalorder %s17, 1
      %s152 = scalar_select %p151, %s17, 1
      %s153 = smul.addr %s152, 8
      %s154 = scalar_lea.vmem %s2, %s153
      %p155 = scmp.lt.s32.totalorder %s17, 1
      %s156 = scalar_select %p155, %s17, 1
      %p157 = scmp.lt.s32.totalorder %s18, 0
      %s158 = scalar_select %p157, %s18, 0
      %s159 = smul.addr %s158, 2
      %s160 = smul.addr %s156, 2
      %s161 = sadd.s32 %s159, %s160
      %s162 = smul.addr %s161, 4
      %s163 = scalar_lea.vmem %s0, %s162
      %p164 = scmp.lt.s32.totalorder %s17, 1
      %s165 = scalar_select %p164, %s17, 1
      %s166 = smul.addr %s165, 8
      %s167 = scalar_lea.vmem %s2, %s166
      %v169 = vld [vmem:[%s163] sm:$0xff]
      %v170 = vld [vmem:[%s1] sm:$0xf]
      %v171 = vld [vmem:[%s1 + $0x4] sm:$0xf]
      %v172 = vld [vmem:[%s1 + $0x8] sm:$0x1]
      %s173 = scalar_lea.vmem %s1, 12
      %v174 = vld [vmem:[%s173] sm:$0xf]
      %v175 = vld [vmem:[%s173 + $0x4] sm:$0xf]
      %v176 = vld [vmem:[%s173 + $0x8] sm:$0x1]
      %v180 = vunpack.c.l.b16 %v174
      %v181 = vunpack.c.l.b16 %v175
      %v182 = vunpack.c.l.b16 %v176
      %v183 = vpack.c.b16 %v181, %v180
      %v184 = vpack.c.b16 %v182, %v182
      %v186 = vunpack.c.l.b16 %v169
      %v187 = vunpack.c.h.b16 %v169
      %v188 = vpack.c.b16 %v186, %v186
      %v189 = vpack.c.b16 %v187, %v187
      %190 = vrot.lane.b32.xlu0 %v188, 127
      %v191 = vpop.permute.xlu0 %190
      %192 = vrot.lane.b32.xlu0 %v189, 127
      %v193 = vpop.permute.xlu0 %192
      %vm194 = vcmask 1039360
      %v195 = vsel %vm194, %v191, %v193
      %vm196 = vcmask 64512
      %v198 = vsel %vm196, %v183, 0
      %v201 = vsel %vm196, %v184, 0
      %vm203 = vcmask 1043456
      %v205 = vsel %vm203, %v195, 0
      %v208 = vsel %vm203, %v193, 0
      %210 = vmatpush.bf16.msra.mxu0 0
      %211 = vmatpush.bf16.msra.mxu0 0
      %212 = vmatpush.bf16.msra.mxu0 0
      %213 = vmatpush.bf16.msra.mxu0 0
      %214 = vmatpush.bf16.msra.mxu0 0
      %215 = vmatpush.bf16.msra.mxu0 0
      %216 = vmatpush.bf16.msra.mxu0 0
      %217 = vmatpush.bf16.msra.mxu0 %v205
      %218 = vmatmul.bf16.gmra.mxu0 %v198
      %v219 = vpop.f32.mrf.mxu0
      %v220 = vadd.f32 0.0, %v219
      %v221 = vpop.f32.mrf.mxu0
      %v222 = vadd.f32 0.0, %v221
      %223 = vmatmul.bf16.gmra.mxu0 %v201
      %v224 = vpop.f32.mrf.mxu0
      %v225 = vadd.f32 0.0, %v224
      %v226 = vpop.f32.mrf.mxu0
      %227 = vdwg.mxu0
      %228 = vmatpush.bf16.msra.mxu0 0
      %229 = vmatpush.bf16.msra.mxu0 0
      %230 = vmatpush.bf16.msra.mxu0 0
      %231 = vmatpush.bf16.msra.mxu0 0
      %232 = vmatpush.bf16.msra.mxu0 0
      %233 = vmatpush.bf16.msra.mxu0 0
      %234 = vmatpush.bf16.msra.mxu0 0
      %235 = vmatpush.bf16.msra.mxu0 %v208
      %236 = vmatmul.bf16.gmra.mxu0 %v198
      %v237 = vpop.f32.mrf.mxu0
      %v238 = vadd.f32 0.0, %v237
      %v239 = vpop.f32.mrf.mxu0
      %v240 = vadd.f32 0.0, %v239
      %241 = vmatmul.bf16.gmra.mxu0 %v201
      %v242 = vpop.f32.mrf.mxu0
      %v243 = vadd.f32 0.0, %v242
      %v244 = vpop.f32.mrf.mxu0
      %245 = vdwg.mxu0
      %v249 = vunpack.c.l.b16 %v170
      %v250 = vunpack.c.l.b16 %v171
      %v251 = vunpack.c.l.b16 %v172
      %v252 = vpack.c.b16 %v250, %v249
      %v253 = vpack.c.b16 %v251, %v251
      %v255 = vsel %vm196, %v252, 0
      %v258 = vsel %vm196, %v253, 0
      %v261 = vsel %vm203, %v188, 0
      %v264 = vsel %vm203, %v189, 0
      %266 = vmatpush.bf16.msra.mxu0 0
      %267 = vmatpush.bf16.msra.mxu0 0
      %268 = vmatpush.bf16.msra.mxu0 0
      %269 = vmatpush.bf16.msra.mxu0 0
      %270 = vmatpush.bf16.msra.mxu0 0
      %271 = vmatpush.bf16.msra.mxu0 0
      %272 = vmatpush.bf16.msra.mxu0 0
      %273 = vmatpush.bf16.msra.mxu0 %v261
      %274 = vmatmul.bf16.gmra.mxu0 %v255
      %v275 = vpop.f32.mrf.mxu0
      %v276 = vadd.f32 %v220, %v275
      %v277 = vpop.f32.mrf.mxu0
      %v278 = vadd.f32 %v222, %v277
      %279 = vmatmul.bf16.gmra.mxu0 %v258
      %v280 = vpop.f32.mrf.mxu0
      %v281 = vadd.f32 %v225, %v280
      %v282 = vpop.f32.mrf.mxu0
      %283 = vdwg.mxu0
      %284 = vmatpush.bf16.msra.mxu0 0
      %285 = vmatpush.bf16.msra.mxu0 0
      %286 = vmatpush.bf16.msra.mxu0 0
      %287 = vmatpush.bf16.msra.mxu0 0
      %288 = vmatpush.bf16.msra.mxu0 0
      %289 = vmatpush.bf16.msra.mxu0 0
      %290 = vmatpush.bf16.msra.mxu0 0
      %291 = vmatpush.bf16.msra.mxu0 %v264
      %292 = vmatmul.bf16.gmra.mxu0 %v255
      %v293 = vpop.f32.mrf.mxu0
      %v294 = vadd.f32 %v238, %v293
      %v295 = vpop.f32.mrf.mxu0
      %v296 = vadd.f32 %v240, %v295
      %297 = vmatmul.bf16.gmra.mxu0 %v258
      %v298 = vpop.f32.mrf.mxu0
      %v299 = vadd.f32 %v243, %v298
      %v300 = vpop.f32.mrf.mxu0
      %301 = vdwg.mxu0
      %s302 = scalar_lea.vmem %s1, 24
      %v303 = vld [vmem:[%s302] sm:$0xf]
      %v304 = vld [vmem:[%s302 + $0x4] sm:$0xf]
      %v305 = vld [vmem:[%s302 + $0x8] sm:$0x1]
      %v309 = vunpack.c.l.b16 %v303
      %v310 = vunpack.c.l.b16 %v304
      %v311 = vunpack.c.l.b16 %v305
      %v312 = vpack.c.b16 %v310, %v309
      %v313 = vpack.c.b16 %v311, %v311
      %314 = vrot.lane.b32.xlu0 %v188, 126
      %v315 = vpop.permute.xlu0 %314
      %316 = vrot.lane.b32.xlu0 %v189, 126
      %v317 = vpop.permute.xlu0 %316
      %vm318 = vcmask 1031168
      %v319 = vsel %vm318, %v315, %v317
      %v321 = vsel %vm196, %v312, 0
      %v324 = vsel %vm196, %v313, 0
      %v327 = vsel %vm203, %v319, 0
      %v330 = vsel %vm203, %v317, 0
      %332 = vmatpush.bf16.msra.mxu0 0
      %333 = vmatpush.bf16.msra.mxu0 0
      %334 = vmatpush.bf16.msra.mxu0 0
      %335 = vmatpush.bf16.msra.mxu0 0
      %336 = vmatpush.bf16.msra.mxu0 0
      %337 = vmatpush.bf16.msra.mxu0 0
      %338 = vmatpush.bf16.msra.mxu0 0
      %339 = vmatpush.bf16.msra.mxu0 %v327
      %340 = vmatmul.bf16.gmra.mxu0 %v321
      %v341 = vpop.f32.mrf.mxu0
      %v342 = vadd.f32 0.0, %v341
      %v343 = vpop.f32.mrf.mxu0
      %v344 = vadd.f32 0.0, %v343
      %345 = vmatmul.bf16.gmra.mxu0 %v324
      %v346 = vpop.f32.mrf.mxu0
      %v347 = vadd.f32 0.0, %v346
      %v348 = vpop.f32.mrf.mxu0
      %349 = vdwg.mxu0
      %350 = vmatpush.bf16.msra.mxu0 0
      %351 = vmatpush.bf16.msra.mxu0 0
      %352 = vmatpush.bf16.msra.mxu0 0
      %353 = vmatpush.bf16.msra.mxu0 0
      %354 = vmatpush.bf16.msra.mxu0 0
      %355 = vmatpush.bf16.msra.mxu0 0
      %356 = vmatpush.bf16.msra.mxu0 0
      %357 = vmatpush.bf16.msra.mxu0 %v330
      %358 = vmatmul.bf16.gmra.mxu0 %v321
      %v359 = vpop.f32.mrf.mxu0
      %v360 = vadd.f32 0.0, %v359
      %v361 = vpop.f32.mrf.mxu0
      %v362 = vadd.f32 0.0, %v361
      %363 = vmatmul.bf16.gmra.mxu0 %v324
      %v364 = vpop.f32.mrf.mxu0
      %v365 = vadd.f32 0.0, %v364
      %v366 = vpop.f32.mrf.mxu0
      %367 = vdwg.mxu0
      %v368 = vadd.f32 %v276, %v342
      %v369 = vadd.f32 %v294, %v360
      %v370 = vadd.f32 %v278, %v344
      %v371 = vadd.f32 %v296, %v362
      %v372 = vadd.f32 %v281, %v347
      %v373 = vadd.f32 %v299, %v365
      %s374 = scalar_lea.vmem %s1, 36
      %v375 = vld [vmem:[%s374] sm:$0xf]
      %v376 = vld [vmem:[%s374 + $0x4] sm:$0xf]
      %v377 = vld [vmem:[%s374 + $0x8] sm:$0x1]
      %v381 = vunpack.c.l.b16 %v375
      %v382 = vunpack.c.l.b16 %v376
      %v383 = vunpack.c.l.b16 %v377
      %v384 = vpack.c.b16 %v382, %v381
      %v385 = vpack.c.b16 %v383, %v383
      %386 = vrot.lane.b32.xlu0 %v188, 125
      %v387 = vpop.permute.xlu0 %386
      %388 = vrot.lane.b32.xlu0 %v189, 125
      %v389 = vpop.permute.xlu0 %388
      %vm390 = vcmask 1022976
      %v391 = vsel %vm390, %v387, %v389
      %v393 = vsel %vm196, %v384, 0
      %v396 = vsel %vm196, %v385, 0
      %v399 = vsel %vm203, %v391, 0
      %v402 = vsel %vm203, %v389, 0
      %404 = vmatpush.bf16.msra.mxu0 0
      %405 = vmatpush.bf16.msra.mxu0 0
      %406 = vmatpush.bf16.msra.mxu0 0
      %407 = vmatpush.bf16.msra.mxu0 0
      %408 = vmatpush.bf16.msra.mxu0 0
      %409 = vmatpush.bf16.msra.mxu0 0
      %410 = vmatpush.bf16.msra.mxu0 0
      %411 = vmatpush.bf16.msra.mxu0 %v399
      %412 = vmatmul.bf16.gmra.mxu0 %v393
      %v413 = vpop.f32.mrf.mxu0
      %v414 = vadd.f32 0.0, %v413
      %v415 = vpop.f32.mrf.mxu0
      %v416 = vadd.f32 0.0, %v415
      %417 = vmatmul.bf16.gmra.mxu0 %v396
      %v418 = vpop.f32.mrf.mxu0
      %v419 = vadd.f32 0.0, %v418
      %v420 = vpop.f32.mrf.mxu0
      %421 = vdwg.mxu0
      %422 = vmatpush.bf16.msra.mxu0 0
      %423 = vmatpush.bf16.msra.mxu0 0
      %424 = vmatpush.bf16.msra.mxu0 0
      %425 = vmatpush.bf16.msra.mxu0 0
      %426 = vmatpush.bf16.msra.mxu0 0
      %427 = vmatpush.bf16.msra.mxu0 0
      %428 = vmatpush.bf16.msra.mxu0 0
      %429 = vmatpush.bf16.msra.mxu0 %v402
      %430 = vmatmul.bf16.gmra.mxu0 %v393
      %v431 = vpop.f32.mrf.mxu0
      %v432 = vadd.f32 0.0, %v431
      %v433 = vpop.f32.mrf.mxu0
      %v434 = vadd.f32 0.0, %v433
      %435 = vmatmul.bf16.gmra.mxu0 %v396
      %v436 = vpop.f32.mrf.mxu0
      %v437 = vadd.f32 0.0, %v436
      %v438 = vpop.f32.mrf.mxu0
      %439 = vdwg.mxu0
      %v440 = vadd.f32 %v368, %v414
      %v441 = vadd.f32 %v369, %v432
      %v442 = vadd.f32 %v370, %v416
      %v443 = vadd.f32 %v371, %v434
      %v444 = vadd.f32 %v372, %v419
      %v445 = vadd.f32 %v373, %v437
      %v446 = vlaneseq
      %v447 = vand.u32 %v446, 127
      %v448 = vadd.s32 %v447, 128
      %vm449 = vcmp.ge.s32.totalorder %v447, 3
      %vm450 = vcmp.ge.s32.totalorder %v448, 3
      %v451 = vsel %vm449, %v440, 0.0
      %v452 = vsel %vm450, %v441, 0.0
      %v453 = vsel %vm449, %v442, 0.0
      %v454 = vsel %vm450, %v443, 0.0
      %v455 = vsel %vm449, %v444, 0.0
      %v456 = vsel %vm450, %v445, 0.0
      %p457 = scmp.eq.s32.totalorder %s18, 0
      // Predicated region
      $region29: #{_tdanet_forward.2} parent=27 // pred_check
        %p458 = pneg %p457
      $region30: #{_tdanet_forward.2} parent=27 // pred_check_branch
        %460 = sbr.rel (%p458) target = $region32
      $region31: #{_tdanet_forward.2} parent=27 // pred_region
        %461 = vst [vmem:[%s167] sm:$0xff] 0.0
      $region32: #{_tdanet_forward.2} parent=27 // pred_fallthru
        _
      %v462 = vld [vmem:[%s167] sm:$0xff]
      %vm463 = vcmp.eq.s32.totalorder %v447, 0
      %vm464 = vcmask 23552
      %v465 = vsel %vm464, %v452, 0.0
      %v466 = vadd.f32 %v451, %v465
      %v467 = vadd.f32 %v466, %v453
      %v468 = vsel %vm464, %v454, 0.0
      %v469 = vadd.f32 %v467, %v468
      %vm470 = vcmask 1040384
      %v471 = vsel %vm470, %v455, 0.0
      %v472 = vadd.f32 %v469, %v471
      %vm473 = vcmask 16384
      %v474 = vsel %vm473, %v456, 0.0
      %v475 = vadd.f32 %v472, %v474
      %476 = vadd.xlane.f32.xlu0 %v475
      %v477 = vpop.xlane.xlu0 %476
      %v478 = vrot.slane %v477, 4
      %v479 = vadd.f32 %v477, %v478
      %v480 = vrot.slane %v479, 2
      %v481 = vadd.f32 %v479, %v480
      %v482 = vrot.slane %v481, 1
      %v483 = vadd.f32 %v481, %v482
      %s484 = vtos %v483
      %v485 = vstv %s484
      %v486 = vsel %vm463, %v485, 0.0
      %vm487 = vcmp.eq.s32.totalorder %v447, 1
      %v488 = vmul.f32 %v451, %v451
      %v489 = vmul.f32 %v452, %v452
      %v490 = vmul.f32 %v453, %v453
      %v491 = vmul.f32 %v454, %v454
      %v492 = vmul.f32 %v455, %v455
      %v493 = vmul.f32 %v456, %v456
      %v494 = vsel %vm464, %v489, 0.0
      %v495 = vadd.f32 %v488, %v494
      %v496 = vadd.f32 %v495, %v490
      %v497 = vsel %vm464, %v491, 0.0
      %v498 = vadd.f32 %v496, %v497
      %v499 = vsel %vm470, %v492, 0.0
      %v500 = vadd.f32 %v498, %v499
      %v501 = vsel %vm473, %v493, 0.0
      %v502 = vadd.f32 %v500, %v501
      %503 = vadd.xlane.f32.xlu0 %v502
      %v504 = vpop.xlane.xlu0 %503
      %v505 = vrot.slane %v504, 4
      %v506 = vadd.f32 %v504, %v505
      %v507 = vrot.slane %v506, 2
      %v508 = vadd.f32 %v506, %v507
      %v509 = vrot.slane %v508, 1
      %v510 = vadd.f32 %v508, %v509
      %s511 = vtos %v510
      %v512 = vstv %s511
      %v513 = vsel %vm487, %v512, 0.0
      %v514 = vadd.f32 %v486, %v513
      %v515 = vadd.f32 %v462, %v514
      %516 = vst [vmem:[%s167] sm:$0xff] %v515
      %p517 = scmp.lt.s32.totalorder %s17, 1
      %s518 = scalar_select %p517, %s17, 1
      %s519 = smul.addr %s518, 8
      %s520 = scalar_lea.vmem %s2, %s519
      // Predicated region
      $region33: #{_tdanet_forward.2} parent=27 // pred_check
        %p521 = pneg %p92
      $region34: #{_tdanet_forward.2} parent=27 // pred_check_branch
        %523 = sbr.rel (%p521) target = $region36
      $region35: #{_tdanet_forward.2} parent=27 // pred_region
        _
      $region36: #{_tdanet_forward.2} parent=27 // pred_fallthru
        _
    $region28: #{_tdanet_forward.2} parent=5 // pred_fallthru
      _
    %p524 = scmp.le.s32.totalorder 2, %s8
    // Predicated region
    $region37: #{_tdanet_forward.2} parent=5 // pred_check
      %p525 = pneg %p524
    $region38: #{_tdanet_forward.2} parent=5 // pred_check_branch
      %527 = sbr.rel (%p525) target = $region40
    $region39: #{_tdanet_forward.2} parent=5 // pred_region
      %s528 = ssub.s32 %s8, 2
      // Predicated region
      $region41: #{_tdanet_forward.2} parent=39 // pred_check
        %p529 = pneg %p98
      $region42: #{_tdanet_forward.2} parent=39 // pred_check_branch
        %531 = sbr.rel (%p529) target = $region44
      $region43: #{_tdanet_forward.2} parent=39 // pred_region
        %p532 = scmp.lt.s32.totalorder %s19, 1
        %s533 = scalar_select %p532, %s19, 1
        %s534 = smul.addr %s533, 8
        %s535 = scalar_lea.vmem %s2, %s534
      $region44: #{_tdanet_forward.2} parent=39 // pred_fallthru
        _
    $region40: #{_tdanet_forward.2} parent=5 // pred_fallthru
      _
  $region6: #{_tdanet_forward.2} parent=0 // loop_footer
    %s12 = sadd.s32 1, %s8
  $region7: #{_tdanet_forward.2} parent=0 // loop_footer_branch
    %7 = sbr.rel target = $region3
  $region8: #{_tdanet_forward.2} parent=0 // loop_exit
    _

// kernel: _tdanet_forward.3
$region0: #{_tdanet_forward.3}
  #allocation0 [shape = 'u32[]', space=smem, size = 0x4, offset = 0x4, fixed_abs, tag = 'smem constant byte address 0x4 - core index']
  #allocation1 [shape = 'u32[72,128]{1,0:T(1,128)}', space=vmem, size = 0x9000, scoped, tag = 'internal scratch']
  %s0 = inlined_call_operand.vmem [shape: bf16[2,1,8,134], index: 0, kind: input, shape index: {}]
  %s1 = inlined_call_operand.vmem [shape: bf16[4,17,8], index: 1, kind: input, shape index: {}]
  %s2 = inlined_call_operand.vmem [shape: f32[192,17], index: 2, kind: input, shape index: {}]
  %s3 = inlined_call_operand.vmem [shape: f32[2,24,8], index: 3, kind: input, shape index: {}]
  %s4 = inlined_call_operand.vmem [shape: f32[2,2,8,128], index: 4, kind: output, shape index: {}]
  %s5 = sld [smem:[#allocation0]]
  $region49: #{_tdanet_forward.3} parent=0
    _
  %s7 = ssub.s32 1, %s5
  %s8 = scalar_select 0, %s7, %s5
  loop: start=0, step=1, limit=4
  $region2: #{_tdanet_forward.3} parent=0 // loop_pre_header
    _
  $region3: #{_tdanet_forward.3} parent=0 // loop_header
    %s10 = sphi 0, %s14
    %p11 = scmp.ge.s32.totalorder %s10, 4
    %s17 = sphi 0, %s29
    %s18 = sphi 0, %s25
    %s19 = sphi 0, %s17
    %s20 = sphi 0, %s18
    %s21 = sphi 0, %s19
    %s22 = sphi 0, %s20
    %s34 = sphi 0, %s36
    %s37 = sphi 0, %s34
    %s38 = sphi 0, %s37
    %s54 = sphi 0, %s38
    %s58 = sphi 0, %s58
    %s60 = sphi 0, %s58
    %s61 = sphi 0, %s60
    %s75 = sphi 0, %s61
    %s79 = sphi 0, %s79
    %s81 = sphi 0, %s79
    %s82 = sphi 0, %s81
    %s96 = sphi 0, %s82
    %s102 = sphi 0, %s104
    %s105 = sphi 0, %s102
    %s106 = sphi 0, %s105
    %s122 = sphi 0, %s106
    %s130 = sphi 0, %s132
    %s133 = sphi 0, %s130
    %s134 = sphi 0, %s133
    %s150 = sphi 0, %s134
  $region4: #{_tdanet_forward.3} parent=0 // loop_header_branch
    %13 = sbr.rel (%p11) target = $region8
  $region5: #{_tdanet_forward.3} parent=0 // loop_body
    %s15 = ssub.s32 %s10, 1
    %s16 = ssub.s32 %s10, 2
    %s23 = sadd.s32 1, %s18
    %p24 = scmp.ge.s32.totalorder %s23, 1
    %s25 = scalar_select %p24, 0, %s23
    %s26 = sadd.s32 1, %s17
    %s27 = scalar_select %p24, %s26, %s17
    %p28 = scmp.ge.s32.totalorder %s27, 2
    %s29 = scalar_select %p28, 0, %s27
    %s30 = ssub.s32 %s17, %s29
    %s31 = ssub.s32 %s18, %s25
    %s32 = sor.u32 %s30, %s31
    %p33 = scmp.eq.s32.totalorder %s32, 0
    %s35 = sadd.s32 %s34, 1
    %s36 = scalar_select %p33, %s34, %s35
    %p39 = pneg %p33
    %p40 = scmp.eq.s32.totalorder %s10, 1
    %p41 = por %p39, %p40
    %p42 = scmp.ne.s32.totalorder %s34, %s37
    %p43 = scmp.eq.s32.totalorder %s10, 0
    %p44 = por %p42, %p43
    %p45 = scmp.ne.s32.totalorder %s34, %s37
    %p46 = scmp.eq.s32.totalorder %s15, 1
    %p47 = por %p45, %p46
    %p48 = scmp.ne.s32.totalorder %s37, %s38
    %p49 = scmp.eq.s32.totalorder %s15, 0
    %p50 = por %p48, %p49
    %p51 = scmp.ne.s32.totalorder %s37, %s38
    %p52 = scmp.eq.s32.totalorder %s16, 1
    %p53 = por %p51, %p52
    %p55 = scmp.ne.s32.totalorder %s38, %s54
    %p56 = scmp.eq.s32.totalorder %s16, 0
    %p57 = por %p55, %p56
    %s59 = sadd.s32 %s58, 1
    %p62 = scmp.eq.s32.totalorder %s10, 1
    %p63 = scmp.ne.s32.totalorder %s58, %s60
    %p64 = scmp.eq.s32.totalorder %s10, 0
    %p65 = por %p63, %p64
    %p66 = scmp.ne.s32.totalorder %s58, %s60
    %p67 = scmp.eq.s32.totalorder %s15, 1
    %p68 = por %p66, %p67
    %p69 = scmp.ne.s32.totalorder %s60, %s61
    %p70 = scmp.eq.s32.totalorder %s15, 0
    %p71 = por %p69, %p70
    %p72 = scmp.ne.s32.totalorder %s60, %s61
    %p73 = scmp.eq.s32.totalorder %s16, 1
    %p74 = por %p72, %p73
    %p76 = scmp.ne.s32.totalorder %s61, %s75
    %p77 = scmp.eq.s32.totalorder %s16, 0
    %p78 = por %p76, %p77
    %s80 = sadd.s32 %s79, 1
    %p83 = scmp.eq.s32.totalorder %s10, 1
    %p84 = scmp.ne.s32.totalorder %s79, %s81
    %p85 = scmp.eq.s32.totalorder %s10, 0
    %p86 = por %p84, %p85
    %p87 = scmp.ne.s32.totalorder %s79, %s81
    %p88 = scmp.eq.s32.totalorder %s15, 1
    %p89 = por %p87, %p88
    %p90 = scmp.ne.s32.totalorder %s81, %s82
    %p91 = scmp.eq.s32.totalorder %s15, 0
    %p92 = por %p90, %p91
    %p93 = scmp.ne.s32.totalorder %s81, %s82
    %p94 = scmp.eq.s32.totalorder %s16, 1
    %p95 = por %p93, %p94
    %p97 = scmp.ne.s32.totalorder %s82, %s96
    %p98 = scmp.eq.s32.totalorder %s16, 0
    %p99 = por %p97, %p98
    %s100 = ssub.s32 %s17, %s29
    %p101 = scmp.eq.s32.totalorder %s100, 0
    %s103 = sadd.s32 %s102, 1
    %s104 = scalar_select %p101, %s102, %s103
    %p107 = pneg %p101
    %p108 = scmp.eq.s32.totalorder %s10, 1
    %p109 = por %p107, %p108
    %p110 = scmp.ne.s32.totalorder %s102, %s105
    %p111 = scmp.eq.s32.totalorder %s10, 0
    %p112 = por %p110, %p111
    %p113 = scmp.ne.s32.totalorder %s102, %s105
    %p114 = scmp.eq.s32.totalorder %s15, 1
    %p115 = por %p113, %p114
    %p116 = scmp.ne.s32.totalorder %s105, %s106
    %p117 = scmp.eq.s32.totalorder %s15, 0
    %p118 = por %p116, %p117
    %p119 = scmp.ne.s32.totalorder %s105, %s106
    %p120 = scmp.eq.s32.totalorder %s16, 1
    %p121 = por %p119, %p120
    %p123 = scmp.ne.s32.totalorder %s106, %s122
    %p124 = scmp.eq.s32.totalorder %s16, 0
    %p125 = por %p123, %p124
    %s126 = ssub.s32 %s17, %s29
    %s127 = ssub.s32 %s18, %s25
    %s128 = sor.u32 %s126, %s127
    %p129 = scmp.eq.s32.totalorder %s128, 0
    %s131 = sadd.s32 %s130, 1
    %s132 = scalar_select %p129, %s130, %s131
    %p135 = pneg %p129
    %p136 = scmp.eq.s32.totalorder %s10, 1
    %p137 = por %p135, %p136
    %p138 = scmp.ne.s32.totalorder %s130, %s133
    %p139 = scmp.eq.s32.totalorder %s10, 0
    %p140 = por %p138, %p139
    %p141 = scmp.ne.s32.totalorder %s130, %s133
    %p142 = scmp.eq.s32.totalorder %s15, 1
    %p143 = por %p141, %p142
    %p144 = scmp.ne.s32.totalorder %s133, %s134
    %p145 = scmp.eq.s32.totalorder %s15, 0
    %p146 = por %p144, %p145
    %p147 = scmp.ne.s32.totalorder %s133, %s134
    %p148 = scmp.eq.s32.totalorder %s16, 1
    %p149 = por %p147, %p148
    %p151 = scmp.ne.s32.totalorder %s134, %s150
    %p152 = scmp.eq.s32.totalorder %s16, 0
    %p153 = por %p151, %p152
    %p154 = scmp.le.s32.totalorder 1, %s10
    %p155 = scmp.lt.s32.totalorder %s10, 3
    %p156 = pnand %p154, %p155
    %p157 = pneg %p156
    // Predicated region
    $region9: #{_tdanet_forward.3} parent=5 // pred_check
      _
    $region10: #{_tdanet_forward.3} parent=5 // pred_check_branch
      %159 = sbr.rel (%p156) target = $region12
    $region11: #{_tdanet_forward.3} parent=5 // pred_region
      %s160 = ssub.s32 %s10, 1
      // Predicated region
      $region13: #{_tdanet_forward.3} parent=11 // pred_check
        %p161 = pneg %p71
      $region14: #{_tdanet_forward.3} parent=11 // pred_check_branch
        %163 = sbr.rel (%p161) target = $region16
      $region15: #{_tdanet_forward.3} parent=11 // pred_region
        _
      $region16: #{_tdanet_forward.3} parent=11 // pred_fallthru
        _
      // Predicated region
      $region17: #{_tdanet_forward.3} parent=11 // pred_check
        %p164 = pneg %p92
      $region18: #{_tdanet_forward.3} parent=11 // pred_check_branch
        %166 = sbr.rel (%p164) target = $region20
      $region19: #{_tdanet_forward.3} parent=11 // pred_region
        _
      $region20: #{_tdanet_forward.3} parent=11 // pred_fallthru
        _
    $region12: #{_tdanet_forward.3} parent=5 // pred_fallthru
      _
    %p167 = scmp.lt.s32.totalorder %s10, 2
    // Predicated region
    $region21: #{_tdanet_forward.3} parent=5 // pred_check
      %p168 = pneg %p167
    $region22: #{_tdanet_forward.3} parent=5 // pred_check_branch
      %170 = sbr.rel (%p168) target = $region24
    $region23: #{_tdanet_forward.3} parent=5 // pred_region
      // Predicated region
      $region25: #{_tdanet_forward.3} parent=23 // pred_check
        %p171 = pneg %p44
      $region26: #{_tdanet_forward.3} parent=23 // pred_check_branch
        %173 = sbr.rel (%p171) target = $region28
      $region27: #{_tdanet_forward.3} parent=23 // pred_region
        %p174 = scmp.lt.s32.totalorder %s17, 1
        %s175 = scalar_select %p174, %s17, 1
        %p176 = scmp.lt.s32.totalorder %s18, 0
        %s177 = scalar_select %p176, %s18, 0
        %s178 = smul.addr %s177, 2
        %s179 = smul.addr %s175, 2
        %s180 = sadd.s32 %s178, %s179
        %s181 = smul.addr %s180, 4
        %s182 = scalar_lea.vmem %s0, %s181
      $region28: #{_tdanet_forward.3} parent=23 // pred_fallthru
        _
      // Predicated region
      $region29: #{_tdanet_forward.3} parent=23 // pred_check
        %p183 = pneg %p112
      $region30: #{_tdanet_forward.3} parent=23 // pred_check_branch
        %185 = sbr.rel (%p183) target = $region32
      $region31: #{_tdanet_forward.3} parent=23 // pred_region
        %p186 = scmp.lt.s32.totalorder %s17, 1
        %s187 = scalar_select %p186, %s17, 1
        %s188 = smul.addr %s187, 3
        %s189 = smul.addr %s188, 8
        %s190 = scalar_lea.vmem %s3, %s189
      $region32: #{_tdanet_forward.3} parent=23 // pred_fallthru
        _
    $region24: #{_tdanet_forward.3} parent=5 // pred_fallthru
      _
    %p191 = scmp.le.s32.totalorder 1, %s10
    %p192 = scmp.lt.s32.totalorder %s10, 3
    %p193 = pnand %p191, %p192
    %p194 = pneg %p193
    // Predicated region
    $region33: #{_tdanet_forward.3} parent=5 // pred_check
      _
    $region34: #{_tdanet_forward.3} parent=5 // pred_check_branch
      %196 = sbr.rel (%p193) target = $region36
    $region35: #{_tdanet_forward.3} parent=5 // pred_region
      %s197 = ssub.s32 %s10, 1
      %p198 = scmp.lt.s32.totalorder %s19, 1
      %s199 = scalar_select %p198, %s19, 1
      %p200 = scmp.lt.s32.totalorder %s20, 0
      %s201 = scalar_select %p200, %s20, 0
      %s202 = smul.addr %s201, 2
      %s203 = smul.addr %s199, 2
      %s204 = sadd.s32 %s202, %s203
      %s205 = smul.addr %s204, 4
      %s206 = scalar_lea.vmem %s0, %s205
      %p207 = pneg %p50
      %p208 = pneg %p47
      %p209 = pneg %p71
      %p210 = pneg %p68
      %p211 = pneg %p92
      %p212 = pneg %p89
      %p213 = scmp.lt.s32.totalorder %s19, 1
      %s214 = scalar_select %p213, %s19, 1
      %s215 = smul.addr %s214, 3
      %s216 = smul.addr %s215, 8
      %s217 = scalar_lea.vmem %s3, %s216
      %p218 = pneg %p118
      %p219 = pneg %p115
      %p220 = pneg %p146
      %p221 = pneg %p143
      %p222 = scmp.lt.s32.totalorder %s19, 1
      %s223 = scalar_select %p222, %s19, 1
      %p224 = scmp.lt.s32.totalorder %s20, 0
      %s225 = scalar_select %p224, %s20, 0
      %s226 = smul.addr %s223, 2
      %s227 = sadd.s32 %s225, %s226
      %s228 = smul.addr %s227, 8
      %s229 = scalar_lea.vmem %s4, %s228
      %p230 = scmp.lt.s32.totalorder %s19, 1
      %s231 = scalar_select %p230, %s19, 1
      %p232 = scmp.lt.s32.totalorder %s20, 0
      %s233 = scalar_select %p232, %s20, 0
      %s234 = smul.addr %s233, 2
      %s235 = smul.addr %s231, 2
      %s236 = sadd.s32 %s234, %s235
      %s237 = smul.addr %s236, 4
      %s238 = scalar_lea.vmem %s0, %s237
      %p239 = scmp.lt.s32.totalorder %s19, 1
      %s240 = scalar_select %p239, %s19, 1
      %s241 = smul.addr %s240, 3
      %s242 = smul.addr %s241, 8
      %s243 = scalar_lea.vmem %s3, %s242
      %p244 = scmp.lt.s32.totalorder %s19, 1
      %s245 = scalar_select %p244, %s19, 1
      %p246 = scmp.lt.s32.totalorder %s20, 0
      %s247 = scalar_select %p246, %s20, 0
      %s248 = smul.addr %s245, 2
      %s249 = sadd.s32 %s247, %s248
      %s250 = smul.addr %s249, 8
      %s251 = scalar_lea.vmem %s4, %s250
      %v253 = vld [vmem:[%s238] sm:$0xff]
      %v254 = vld [vmem:[%s1] sm:$0xf]
      %v255 = vld [vmem:[%s1 + $0x4] sm:$0xf]
      %v256 = vld [vmem:[%s1 + $0x8] sm:$0x1]
      %s257 = scalar_lea.vmem %s1, 12
      %v258 = vld [vmem:[%s257] sm:$0xf]
      %v259 = vld [vmem:[%s257 + $0x4] sm:$0xf]
      %v260 = vld [vmem:[%s257 + $0x8] sm:$0x1]
      %v264 = vunpack.c.l.b16 %v258
      %v265 = vunpack.c.l.b16 %v259
      %v266 = vunpack.c.l.b16 %v260
      %v267 = vpack.c.b16 %v265, %v264
      %v268 = vpack.c.b16 %v266, %v266
      %v270 = vunpack.c.l.b16 %v253
      %v271 = vunpack.c.h.b16 %v253
      %v272 = vpack.c.b16 %v270, %v270
      %v273 = vpack.c.b16 %v271, %v271
      %274 = vrot.lane.b32.xlu0 %v272, 127
      %v275 = vpop.permute.xlu0 %274
      %276 = vrot.lane.b32.xlu0 %v273, 127
      %v277 = vpop.permute.xlu0 %276
      %vm278 = vcmask 1039360
      %v279 = vsel %vm278, %v275, %v277
      %vm280 = vcmask 64512
      %v282 = vsel %vm280, %v267, 0
      %v285 = vsel %vm280, %v268, 0
      %vm287 = vcmask 1043456
      %v289 = vsel %vm287, %v279, 0
      %v292 = vsel %vm287, %v277, 0
      %294 = vmatpush.bf16.msra.mxu0 0
      %295 = vmatpush.bf16.msra.mxu0 0
      %296 = vmatpush.bf16.msra.mxu0 0
      %297 = vmatpush.bf16.msra.mxu0 0
      %298 = vmatpush.bf16.msra.mxu0 0
      %299 = vmatpush.bf16.msra.mxu0 0
      %300 = vmatpush.bf16.msra.mxu0 0
      %301 = vmatpush.bf16.msra.mxu0 %v289
      %302 = vmatmul.bf16.gmra.mxu0 %v282
      %v303 = vpop.f32.mrf.mxu0
      %v304 = vadd.f32 0.0, %v303
      %v305 = vpop.f32.mrf.mxu0
      %v306 = vadd.f32 0.0, %v305
      %307 = vmatmul.bf16.gmra.mxu0 %v285
      %v308 = vpop.f32.mrf.mxu0
      %v309 = vadd.f32 0.0, %v308
      %v310 = vpop.f32.mrf.mxu0
      %311 = vdwg.mxu0
      %312 = vmatpush.bf16.msra.mxu0 0
      %313 = vmatpush.bf16.msra.mxu0 0
      %314 = vmatpush.bf16.msra.mxu0 0
      %315 = vmatpush.bf16.msra.mxu0 0
      %316 = vmatpush.bf16.msra.mxu0 0
      %317 = vmatpush.bf16.msra.mxu0 0
      %318 = vmatpush.bf16.msra.mxu0 0
      %319 = vmatpush.bf16.msra.mxu0 %v292
      %320 = vmatmul.bf16.gmra.mxu0 %v282
      %v321 = vpop.f32.mrf.mxu0
      %v322 = vadd.f32 0.0, %v321
      %v323 = vpop.f32.mrf.mxu0
      %v324 = vadd.f32 0.0, %v323
      %325 = vmatmul.bf16.gmra.mxu0 %v285
      %v326 = vpop.f32.mrf.mxu0
      %v327 = vadd.f32 0.0, %v326
      %v328 = vpop.f32.mrf.mxu0
      %329 = vdwg.mxu0
      %v333 = vunpack.c.l.b16 %v254
      %v334 = vunpack.c.l.b16 %v255
      %v335 = vunpack.c.l.b16 %v256
      %v336 = vpack.c.b16 %v334, %v333
      %v337 = vpack.c.b16 %v335, %v335
      %v339 = vsel %vm280, %v336, 0
      %v342 = vsel %vm280, %v337, 0
      %v345 = vsel %vm287, %v272, 0
      %v348 = vsel %vm287, %v273, 0
      %350 = vmatpush.bf16.msra.mxu0 0
      %351 = vmatpush.bf16.msra.mxu0 0
      %352 = vmatpush.bf16.msra.mxu0 0
      %353 = vmatpush.bf16.msra.mxu0 0
      %354 = vmatpush.bf16.msra.mxu0 0
      %355 = vmatpush.bf16.msra.mxu0 0
      %356 = vmatpush.bf16.msra.mxu0 0
      %357 = vmatpush.bf16.msra.mxu0 %v345
      %358 = vmatmul.bf16.gmra.mxu0 %v339
      %v359 = vpop.f32.mrf.mxu0
      %v360 = vadd.f32 %v304, %v359
      %v361 = vpop.f32.mrf.mxu0
      %v362 = vadd.f32 %v306, %v361
      %363 = vmatmul.bf16.gmra.mxu0 %v342
      %v364 = vpop.f32.mrf.mxu0
      %v365 = vadd.f32 %v309, %v364
      %v366 = vpop.f32.mrf.mxu0
      %367 = vdwg.mxu0
      %368 = vmatpush.bf16.msra.mxu0 0
      %369 = vmatpush.bf16.msra.mxu0 0
      %370 = vmatpush.bf16.msra.mxu0 0
      %371 = vmatpush.bf16.msra.mxu0 0
      %372 = vmatpush.bf16.msra.mxu0 0
      %373 = vmatpush.bf16.msra.mxu0 0
      %374 = vmatpush.bf16.msra.mxu0 0
      %375 = vmatpush.bf16.msra.mxu0 %v348
      %376 = vmatmul.bf16.gmra.mxu0 %v339
      %v377 = vpop.f32.mrf.mxu0
      %v378 = vadd.f32 %v322, %v377
      %v379 = vpop.f32.mrf.mxu0
      %v380 = vadd.f32 %v324, %v379
      %381 = vmatmul.bf16.gmra.mxu0 %v342
      %v382 = vpop.f32.mrf.mxu0
      %v383 = vadd.f32 %v327, %v382
      %v384 = vpop.f32.mrf.mxu0
      %385 = vdwg.mxu0
      %s386 = scalar_lea.vmem %s1, 24
      %v387 = vld [vmem:[%s386] sm:$0xf]
      %v388 = vld [vmem:[%s386 + $0x4] sm:$0xf]
      %v389 = vld [vmem:[%s386 + $0x8] sm:$0x1]
      %v393 = vunpack.c.l.b16 %v387
      %v394 = vunpack.c.l.b16 %v388
      %v395 = vunpack.c.l.b16 %v389
      %v396 = vpack.c.b16 %v394, %v393
      %v397 = vpack.c.b16 %v395, %v395
      %398 = vrot.lane.b32.xlu0 %v272, 126
      %v399 = vpop.permute.xlu0 %398
      %400 = vrot.lane.b32.xlu0 %v273, 126
      %v401 = vpop.permute.xlu0 %400
      %vm402 = vcmask 1031168
      %v403 = vsel %vm402, %v399, %v401
      %v405 = vsel %vm280, %v396, 0
      %v408 = vsel %vm280, %v397, 0
      %v411 = vsel %vm287, %v403, 0
      %v414 = vsel %vm287, %v401, 0
      %416 = vmatpush.bf16.msra.mxu0 0
      %417 = vmatpush.bf16.msra.mxu0 0
      %418 = vmatpush.bf16.msra.mxu0 0
      %419 = vmatpush.bf16.msra.mxu0 0
      %420 = vmatpush.bf16.msra.mxu0 0
      %421 = vmatpush.bf16.msra.mxu0 0
      %422 = vmatpush.bf16.msra.mxu0 0
      %423 = vmatpush.bf16.msra.mxu0 %v411
      %424 = vmatmul.bf16.gmra.mxu0 %v405
      %v425 = vpop.f32.mrf.mxu0
      %v426 = vadd.f32 0.0, %v425
      %v427 = vpop.f32.mrf.mxu0
      %v428 = vadd.f32 0.0, %v427
      %429 = vmatmul.bf16.gmra.mxu0 %v408
      %v430 = vpop.f32.mrf.mxu0
      %v431 = vadd.f32 0.0, %v430
      %v432 = vpop.f32.mrf.mxu0
      %433 = vdwg.mxu0
      %434 = vmatpush.bf16.msra.mxu0 0
      %435 = vmatpush.bf16.msra.mxu0 0
      %436 = vmatpush.bf16.msra.mxu0 0
      %437 = vmatpush.bf16.msra.mxu0 0
      %438 = vmatpush.bf16.msra.mxu0 0
      %439 = vmatpush.bf16.msra.mxu0 0
      %440 = vmatpush.bf16.msra.mxu0 0
      %441 = vmatpush.bf16.msra.mxu0 %v414
      %442 = vmatmul.bf16.gmra.mxu0 %v405
      %v443 = vpop.f32.mrf.mxu0
      %v444 = vadd.f32 0.0, %v443
      %v445 = vpop.f32.mrf.mxu0
      %v446 = vadd.f32 0.0, %v445
      %447 = vmatmul.bf16.gmra.mxu0 %v408
      %v448 = vpop.f32.mrf.mxu0
      %v449 = vadd.f32 0.0, %v448
      %v450 = vpop.f32.mrf.mxu0
      %451 = vdwg.mxu0
      %v452 = vadd.f32 %v360, %v426
      %v453 = vadd.f32 %v378, %v444
      %v454 = vadd.f32 %v362, %v428
      %v455 = vadd.f32 %v380, %v446
      %v456 = vadd.f32 %v365, %v431
      %v457 = vadd.f32 %v383, %v449
      %s458 = scalar_lea.vmem %s1, 36
      %v459 = vld [vmem:[%s458] sm:$0xf]
      %v460 = vld [vmem:[%s458 + $0x4] sm:$0xf]
      %v461 = vld [vmem:[%s458 + $0x8] sm:$0x1]
      %v465 = vunpack.c.l.b16 %v459
      %v466 = vunpack.c.l.b16 %v460
      %v467 = vunpack.c.l.b16 %v461
      %v468 = vpack.c.b16 %v466, %v465
      %v469 = vpack.c.b16 %v467, %v467
      %470 = vrot.lane.b32.xlu0 %v272, 125
      %v471 = vpop.permute.xlu0 %470
      %472 = vrot.lane.b32.xlu0 %v273, 125
      %v473 = vpop.permute.xlu0 %472
      %vm474 = vcmask 1022976
      %v475 = vsel %vm474, %v471, %v473
      %v477 = vsel %vm280, %v468, 0
      %v480 = vsel %vm280, %v469, 0
      %v483 = vsel %vm287, %v475, 0
      %v486 = vsel %vm287, %v473, 0
      %488 = vmatpush.bf16.msra.mxu0 0
      %489 = vmatpush.bf16.msra.mxu0 0
      %490 = vmatpush.bf16.msra.mxu0 0
      %491 = vmatpush.bf16.msra.mxu0 0
      %492 = vmatpush.bf16.msra.mxu0 0
      %493 = vmatpush.bf16.msra.mxu0 0
      %494 = vmatpush.bf16.msra.mxu0 0
      %495 = vmatpush.bf16.msra.mxu0 %v483
      %496 = vmatmul.bf16.gmra.mxu0 %v477
      %v497 = vpop.f32.mrf.mxu0
      %v498 = vadd.f32 0.0, %v497
      %v499 = vpop.f32.mrf.mxu0
      %v500 = vadd.f32 0.0, %v499
      %501 = vmatmul.bf16.gmra.mxu0 %v480
      %v502 = vpop.f32.mrf.mxu0
      %v503 = vadd.f32 0.0, %v502
      %v504 = vpop.f32.mrf.mxu0
      %505 = vdwg.mxu0
      %506 = vmatpush.bf16.msra.mxu0 0
      %507 = vmatpush.bf16.msra.mxu0 0
      %508 = vmatpush.bf16.msra.mxu0 0
      %509 = vmatpush.bf16.msra.mxu0 0
      %510 = vmatpush.bf16.msra.mxu0 0
      %511 = vmatpush.bf16.msra.mxu0 0
      %512 = vmatpush.bf16.msra.mxu0 0
      %513 = vmatpush.bf16.msra.mxu0 %v486
      %514 = vmatmul.bf16.gmra.mxu0 %v477
      %v515 = vpop.f32.mrf.mxu0
      %v516 = vadd.f32 0.0, %v515
      %v517 = vpop.f32.mrf.mxu0
      %v518 = vadd.f32 0.0, %v517
      %519 = vmatmul.bf16.gmra.mxu0 %v480
      %v520 = vpop.f32.mrf.mxu0
      %v521 = vadd.f32 0.0, %v520
      %v522 = vpop.f32.mrf.mxu0
      %523 = vdwg.mxu0
      %v524 = vadd.f32 %v452, %v498
      %v525 = vadd.f32 %v453, %v516
      %v526 = vadd.f32 %v454, %v500
      %v527 = vadd.f32 %v455, %v518
      %v528 = vadd.f32 %v456, %v503
      %v529 = vadd.f32 %v457, %v521
      %v530 = vld [vmem:[%s243] sm:$0xff]
      %v531 = vld [vmem:[%s243 + $0x8] sm:$0xff]
      %v532 = vld [vmem:[%s243 + $0x10] sm:$0xff]
      %v534 = vrot.slane %v530, 2
      %535 = vrot.lane.b32.xlu0 %v534, 122
      %v536 = vpop.permute.xlu0 %535
      %s537 = vtos %v536
      %v538 = vstv %s537
      %v540 = vsub.f32 %v524, %v538
      %v541 = vsub.f32 %v525, %v538
      %v542 = vsub.f32 %v526, %v538
      %v543 = vsub.f32 %v527, %v538
      %v544 = vsub.f32 %v528, %v538
      %v545 = vsub.f32 %v529, %v538
      %v546 = vrot.slane %v530, 3
      %547 = vrot.lane.b32.xlu0 %v546, 122
      %v548 = vpop.permute.xlu0 %547
      %s549 = vtos %v548
      %v550 = vstv %s549
      %v552 = vmul.f32 %v540, %v550
      %v553 = vmul.f32 %v541, %v550
      %v554 = vmul.f32 %v542, %v550
      %v555 = vmul.f32 %v543, %v550
      %v556 = vmul.f32 %v544, %v550
      %v557 = vmul.f32 %v545, %v550
      %558 = vset.pattern.permute.xlu0 0
      %559 = vperm.xlu0 %558, %v530
      %v560 = vpop.permute.xlu0 %559
      %563 = vset.pattern.permute.xlu0 0
      %564 = vperm.xlu0 %563, %v531
      %v565 = vpop.permute.xlu0 %564
      %568 = vset.pattern.permute.xlu0 0
      %569 = vperm.xlu0 %568, %v532
      %v570 = vpop.permute.xlu0 %569
      %v572 = vmul.f32 %v552, %v560
      %v573 = vmul.f32 %v553, %v560
      %v574 = vmul.f32 %v554, %v565
      %v575 = vmul.f32 %v555, %v565
      %v576 = vmul.f32 %v556, %v570
      %v577 = vmul.f32 %v557, %v570
      %578 = vset.pattern.permute.xlu0 1
      %579 = vperm.xlu0 %578, %v530
      %v580 = vpop.permute.xlu0 %579
      %582 = vset.pattern.permute.xlu0 1
      %583 = vperm.xlu0 %582, %v531
      %v584 = vpop.permute.xlu0 %583
      %586 = vset.pattern.permute.xlu0 1
      %587 = vperm.xlu0 %586, %v532
      %v588 = vpop.permute.xlu0 %587
      %v590 = vadd.f32 %v572, %v580
      %v591 = vadd.f32 %v573, %v580
      %v592 = vadd.f32 %v574, %v584
      %v593 = vadd.f32 %v575, %v584
      %v594 = vadd.f32 %v576, %v588
      %v595 = vadd.f32 %v577, %v588
      %v596 = vld [vmem:[%s2] sm:$0xff]
      %v597 = vld [vmem:[%s2 + $0x8] sm:$0xff]
      %598 = vset.pattern.permute.xlu0 2
      %599 = vperm.xlu0 %598, %v530
      %v600 = vpop.permute.xlu0 %599
      %602 = vset.pattern.permute.xlu0 2
      %603 = vperm.xlu0 %602, %v531
      %v604 = vpop.permute.xlu0 %603
      %vm606 = vcmask 138240
      %v608 = vsel %vm606, %v596, 0
      %v611 = vsel %vm606, %v597, 0
      %vm613 = vcmask 1040384
      %v615 = vsel %vm613, %v594, 0
      %v618 = vsel %vm613, %v595, 0
      %620 = vmatpush.msra.mxu0 0.0
      %621 = vmatpush.msra.mxu0 0.0
      %622 = vmatpush.msra.mxu0 0.0
      %623 = vmatpush.msra.mxu0 0.0
      %624 = vmatpush.msra.mxu0 0.0
      %625 = vmatpush.msra.mxu0 0.0
      %626 = vmatpush.msra.mxu0 0.0
      %627 = vmatpush.msra.mxu0 0.0
      %628 = vmatpush.msra.mxu0 0.0
      %629 = vmatpush.msra.mxu0 0.0
      %630 = vmatpush.msra.mxu0 0.0
      %631 = vmatpush.msra.mxu0 0.0
      %632 = vmatpush.msra.mxu0 0.0
      %633 = vmatpush.msra.mxu0 %v615
      %634 = vmatpush.msra.mxu0 %v592
      %635 = vmatpush.msra.mxu0 %v590
      %636 = vmatmul.f32.gmra.mxu0 %v608
      %v637 = vpop.f32.mrf.mxu0
      %v638 = vadd.f32 %v600, %v637
      %639 = vmatmul.f32.gmra.mxu0 %v611
      %v640 = vpop.f32.mrf.mxu0
      %v641 = vadd.f32 %v604, %v640
      %642 = vdwg.mxu0
      %643 = vmatpush.msra.mxu0 0.0
      %644 = vmatpush.msra.mxu0 0.0
      %645 = vmatpush.msra.mxu0 0.0
      %646 = vmatpush.msra.mxu0 0.0
      %647 = vmatpush.msra.mxu0 0.0
      %648 = vmatpush.msra.mxu0 0.0
      %649 = vmatpush.msra.mxu0 0.0
      %650 = vmatpush.msra.mxu0 0.0
      %651 = vmatpush.msra.mxu0 0.0
      %652 = vmatpush.msra.mxu0 0.0
      %653 = vmatpush.msra.mxu0 0.0
      %654 = vmatpush.msra.mxu0 0.0
      %655 = vmatpush.msra.mxu0 0.0
      %656 = vmatpush.msra.mxu0 %v618
      %657 = vmatpush.msra.mxu0 %v593
      %658 = vmatpush.msra.mxu0 %v591
      %659 = vmatmul.f32.gmra.mxu0 %v608
      %v660 = vpop.f32.mrf.mxu0
      %v661 = vadd.f32 %v600, %v660
      %662 = vmatmul.f32.gmra.mxu0 %v611
      %v663 = vpop.f32.mrf.mxu0
      %v664 = vadd.f32 %v604, %v663
      %665 = vdwg.mxu0
      %v666 = vadd.f32 %v638, %v638
      %v667 = vadd.f32 %v661, %v661
      %v668 = vadd.f32 %v641, %v641
      %v669 = vadd.f32 %v664, %v664
      %670 = vset.pattern.permute.xlu0 3
      %671 = vperm.xlu0 %670, %v530
      %v672 = vpop.permute.xlu0 %671
      %674 = vset.pattern.permute.xlu0 3
      %675 = vperm.xlu0 %674, %v531
      %v676 = vpop.permute.xlu0 %675
      %v678 = vmul.f32 %v666, %v672
      %v679 = vmul.f32 %v667, %v672
      %v680 = vmul.f32 %v668, %v676
      %v681 = vmul.f32 %v669, %v676
      %682 = vset.pattern.permute.xlu0 4
      %683 = vperm.xlu0 %682, %v530
      %v684 = vpop.permute.xlu0 %683
      %686 = vset.pattern.permute.xlu0 4
      %687 = vperm.xlu0 %686, %v531
      %v688 = vpop.permute.xlu0 %687
      %v690 = vadd.f32 %v678, %v684
      %v691 = vadd.f32 %v679, %v684
      %v692 = vadd.f32 %v680, %v688
      %v693 = vadd.f32 %v681, %v688
      %vm694 = vcmp.ge.f32.partialorder %v690, 0.0
      %vm695 = vcmp.ge.f32.partialorder %v691, 0.0
      %vm696 = vcmp.ge.f32.partialorder %v692, 0.0
      %vm697 = vcmp.ge.f32.partialorder %v693, 0.0
      %698 = vrot.lane.b32.xlu0 %v530, 122
      %v699 = vpop.permute.xlu0 %698
      %s700 = vtos %v699
      %v701 = vstv %s700
      %v703 = vmul.f32 %v701, %v690
      %v704 = vmul.f32 %v701, %v691
      %v705 = vmul.f32 %v701, %v692
      %v706 = vmul.f32 %v701, %v693
      %v707 = vsel %vm694, %v690, %v703
      %v708 = vsel %vm695, %v691, %v704
      %v709 = vsel %vm696, %v692, %v705
      %v710 = vsel %vm697, %v693, %v706
      %vm711 = vcmp.ge.f32.partialorder %v707, 0.0
      %vm712 = vcmp.ge.f32.partialorder %v708, 0.0
      %vm713 = vcmp.ge.f32.partialorder %v709, 0.0
      %vm714 = vcmp.ge.f32.partialorder %v710, 0.0
      %v715 = vrot.slane %v530, 1
      %716 = vrot.lane.b32.xlu0 %v715, 122
      %v717 = vpop.permute.xlu0 %716
      %s718 = vtos %v717
      %v719 = vstv %s718
      %v721 = vmul.f32 %v719, %v707
      %v722 = vmul.f32 %v719, %v708
      %v723 = vmul.f32 %v719, %v709
      %v724 = vmul.f32 %v719, %v710
      %v725 = vsel %vm711, %v707, %v721
      %v726 = vsel %vm712, %v708, %v722
      %v727 = vsel %vm713, %v709, %v723
      %v728 = vsel %vm714, %v710, %v724
      %v729 = vld [vmem:[%s2 + $0x10] sm:$0xff]
      %v730 = vld [vmem:[%s2 + $0x18] sm:$0xff]
      %v731 = vld [vmem:[%s2 + $0x20] sm:$0x1]
      %732 = vset.pattern.permute.xlu0 5
      %733 = vperm.xlu0 %732, %v530
      %v734 = vpop.permute.xlu0 %733
      %736 = vset.pattern.permute.xlu0 5
      %737 = vperm.xlu0 %736, %v531
      %v738 = vpop.permute.xlu0 %737
      %740 = vset.pattern.permute.xlu0 5
      %741 = vperm.xlu0 %740, %v532
      %v742 = vpop.permute.xlu0 %741
      %vm744 = vcmask 130048
      %v746 = vsel %vm744, %v729, 0
      %v749 = vsel %vm744, %v730, 0
      %v752 = vsel %vm744, %v731, 0
      %754 = vmatpush.msra.mxu0 0.0
      %755 = vmatpush.msra.mxu0 0.0
      %756 = vmatpush.msra.mxu0 0.0
      %757 = vmatpush.msra.mxu0 0.0
      %758 = vmatpush.msra.mxu0 0.0
      %759 = vmatpush.msra.mxu0 0.0
      %760 = vmatpush.msra.mxu0 0.0
      %761 = vmatpush.msra.mxu0 0.0
      %762 = vmatpush.msra.mxu0 0.0
      %763 = vmatpush.msra.mxu0 0.0
      %764 = vmatpush.msra.mxu0 0.0
      %765 = vmatpush.msra.mxu0 0.0
      %766 = vmatpush.msra.mxu0 0.0
      %767 = vmatpush.msra.mxu0 0.0
      %768 = vmatpush.msra.mxu0 %v727
      %769 = vmatpush.msra.mxu0 %v725
      %770 = vmatmul.f32.gmra.mxu0 %v746
      %v771 = vpop.f32.mrf.mxu0
      %v772 = vadd.f32 %v734, %v771
      %773 = vmatmul.f32.gmra.mxu0 %v749
      %v774 = vpop.f32.mrf.mxu0
      %v775 = vadd.f32 %v738, %v774
      %776 = vmatmul.f32.gmra.mxu0 %v752
      %v777 = vpop.f32.mrf.mxu0
      %v778 = vadd.f32 %v742, %v777
      %779 = vdwg.mxu0
      %780 = vmatpush.msra.mxu0 0.0
      %781 = vmatpush.msra.mxu0 0.0
      %782 = vmatpush.msra.mxu0 0.0
      %783 = vmatpush.msra.mxu0 0.0
      %784 = vmatpush.msra.mxu0 0.0
      %785 = vmatpush.msra.mxu0 0.0
      %786 = vmatpush.msra.mxu0 0.0
      %787 = vmatpush.msra.mxu0 0.0
      %788 = vmatpush.msra.mxu0 0.0
      %789 = vmatpush.msra.mxu0 0.0
      %790 = vmatpush.msra.mxu0 0.0
      %791 = vmatpush.msra.mxu0 0.0
      %792 = vmatpush.msra.mxu0 0.0
      %793 = vmatpush.msra.mxu0 0.0
      %794 = vmatpush.msra.mxu0 %v728
      %795 = vmatpush.msra.mxu0 %v726
      %796 = vmatmul.f32.gmra.mxu0 %v746
      %v797 = vpop.f32.mrf.mxu0
      %v798 = vadd.f32 %v734, %v797
      %799 = vmatmul.f32.gmra.mxu0 %v749
      %v800 = vpop.f32.mrf.mxu0
      %v801 = vadd.f32 %v738, %v800
      %802 = vmatmul.f32.gmra.mxu0 %v752
      %v803 = vpop.f32.mrf.mxu0
      %v804 = vadd.f32 %v742, %v803
      %805 = vdwg.mxu0
      %v806 = vld [vmem:[%s2 + $0x28] sm:$0xff]
      %v807 = vld [vmem:[%s2 + $0x30] sm:$0xff]
      %v808 = vld [vmem:[%s2 + $0x38] sm:$0x1]
      %809 = vset.pattern.permute.xlu0 7
      %810 = vperm.xlu0 %809, %v530
      %v811 = vpop.permute.xlu0 %810
      %813 = vset.pattern.permute.xlu0 7
      %814 = vperm.xlu0 %813, %v531
      %v815 = vpop.permute.xlu0 %814
      %817 = vset.pattern.permute.xlu0 7
      %818 = vperm.xlu0 %817, %v532
      %v819 = vpop.permute.xlu0 %818
      %v822 = vsel %vm744, %v806, 0
      %v825 = vsel %vm744, %v807, 0
      %v828 = vsel %vm744, %v808, 0
      %830 = vmatpush.msra.mxu0 0.0
      %831 = vmatpush.msra.mxu0 0.0
      %832 = vmatpush.msra.mxu0 0.0
      %833 = vmatpush.msra.mxu0 0.0
      %834 = vmatpush.msra.mxu0 0.0
      %835 = vmatpush.msra.mxu0 0.0
      %836 = vmatpush.msra.mxu0 0.0
      %837 = vmatpush.msra.mxu0 0.0
      %838 = vmatpush.msra.mxu0 0.0
      %839 = vmatpush.msra.mxu0 0.0
      %840 = vmatpush.msra.mxu0 0.0
      %841 = vmatpush.msra.mxu0 0.0
      %842 = vmatpush.msra.mxu0 0.0
      %843 = vmatpush.msra.mxu0 0.0
      %844 = vmatpush.msra.mxu0 %v727
      %845 = vmatpush.msra.mxu0 %v725
      %846 = vmatmul.f32.gmra.mxu0 %v822
      %v847 = vpop.f32.mrf.mxu0
      %v848 = vadd.f32 %v811, %v847
      %849 = vmatmul.f32.gmra.mxu0 %v825
      %v850 = vpop.f32.mrf.mxu0
      %v851 = vadd.f32 %v815, %v850
      %852 = vmatmul.f32.gmra.mxu0 %v828
      %v853 = vpop.f32.mrf.mxu0
      %v854 = vadd.f32 %v819, %v853
      %855 = vdwg.mxu0
      %856 = vmatpush.msra.mxu0 0.0
      %857 = vmatpush.msra.mxu0 0.0
      %858 = vmatpush.msra.mxu0 0.0
      %859 = vmatpush.msra.mxu0 0.0
      %860 = vmatpush.msra.mxu0 0.0
      %861 = vmatpush.msra.mxu0 0.0
      %862 = vmatpush.msra.mxu0 0.0
      %863 = vmatpush.msra.mxu0 0.0
      %864 = vmatpush.msra.mxu0 0.0
      %865 = vmatpush.msra.mxu0 0.0
      %866 = vmatpush.msra.mxu0 0.0
      %867 = vmatpush.msra.mxu0 0.0
      %868 = vmatpush.msra.mxu0 0.0
      %869 = vmatpush.msra.mxu0 0.0
      %870 = vmatpush.msra.mxu0 %v728
      %871 = vmatpush.msra.mxu0 %v726
      %872 = vmatmul.f32.gmra.mxu0 %v822
      %v873 = vpop.f32.mrf.mxu0
      %v874 = vadd.f32 %v811, %v873
      %875 = vmatmul.f32.gmra.mxu0 %v825
      %v876 = vpop.f32.mrf.mxu0
      %v877 = vadd.f32 %v815, %v876
      %878 = vmatmul.f32.gmra.mxu0 %v828
      %v879 = vpop.f32.mrf.mxu0
      %v880 = vadd.f32 %v819, %v879
      %881 = vdwg.mxu0
      %v882 = vmax.f32 %v772, 0.0
      %v883 = vmax.f32 %v798, 0.0
      %v884 = vmax.f32 %v775, 0.0
      %v885 = vmax.f32 %v801, 0.0
      %v886 = vmax.f32 %v778, 0.0
      %v887 = vmax.f32 %v804, 0.0
      %v888 = vmul.f32 %v882, %v524
      %v889 = vmul.f32 %v883, %v525
      %v890 = vmul.f32 %v884, %v526
      %v891 = vmul.f32 %v885, %v527
      %v892 = vmul.f32 %v886, %v528
      %v893 = vmul.f32 %v887, %v529
      %v894 = vmax.f32 %v848, 0.0
      %v895 = vmax.f32 %v874, 0.0
      %v896 = vmax.f32 %v851, 0.0
      %v897 = vmax.f32 %v877, 0.0
      %v898 = vmax.f32 %v854, 0.0
      %v899 = vmax.f32 %v880, 0.0
      %v900 = vmul.f32 %v894, %v524
      %v901 = vmul.f32 %v895, %v525
      %v902 = vmul.f32 %v896, %v526
      %v903 = vmul.f32 %v897, %v527
      %v904 = vmul.f32 %v898, %v528
      %v905 = vmul.f32 %v899, %v529
      %v906 = vld [vmem:[%s2 + $0x40] sm:$0xff]
      %v907 = vld [vmem:[%s2 + $0x48] sm:$0xff]
      %v908 = vld [vmem:[%s2 + $0x80] sm:$0xff]
      %v909 = vld [vmem:[%s2 + $0x88] sm:$0xff]
      %v911 = vsel %vm606, %v908, 0
      %v914 = vsel %vm606, %v909, 0
      %v917 = vsel %vm613, %v904, 0
      %919 = vmatpush.msra.mxu0 0.0
      %920 = vmatpush.msra.mxu0 0.0
      %921 = vmatpush.msra.mxu0 0.0
      %922 = vmatpush.msra.mxu0 0.0
      %923 = vmatpush.msra.mxu0 0.0
      %924 = vmatpush.msra.mxu0 0.0
      %925 = vmatpush.msra.mxu0 0.0
      %926 = vmatpush.msra.mxu0 0.0
      %927 = vmatpush.msra.mxu0 0.0
      %928 = vmatpush.msra.mxu0 0.0
      %929 = vmatpush.msra.mxu0 0.0
      %930 = vmatpush.msra.mxu0 0.0
      %931 = vmatpush.msra.mxu0 0.0
      %932 = vmatpush.msra.mxu0 %v917
      %933 = vmatpush.msra.mxu0 %v902
      %934 = vmatpush.msra.mxu0 %v900
      %935 = vmatmul.f32.gmra.mxu0 %v911
      %v936 = vpop.f32.mrf.mxu0
      %v937 = vadd.f32 0.0, %v936
      %938 = vmatmul.f32.gmra.mxu0 %v914
      %v939 = vpop.f32.mrf.mxu0
      %v940 = vadd.f32 0.0, %v939
      %941 = vdwg.mxu0
      %v943 = vsel %vm606, %v906, 0
      %v946 = vsel %vm606, %v907, 0
      %v949 = vsel %vm613, %v892, 0
      %951 = vmatpush.msra.mxu0 0.0
      %952 = vmatpush.msra.mxu0 0.0
      %953 = vmatpush.msra.mxu0 0.0
      %954 = vmatpush.msra.mxu0 0.0
      %955 = vmatpush.msra.mxu0 0.0
      %956 = vmatpush.msra.mxu0 0.0
      %957 = vmatpush.msra.mxu0 0.0
      %958 = vmatpush.msra.mxu0 0.0
      %959 = vmatpush.msra.mxu0 0.0
      %960 = vmatpush.msra.mxu0 0.0
      %961 = vmatpush.msra.mxu0 0.0
      %962 = vmatpush.msra.mxu0 0.0
      %963 = vmatpush.msra.mxu0 0.0
      %964 = vmatpush.msra.mxu0 %v949
      %965 = vmatpush.msra.mxu0 %v890
      %966 = vmatpush.msra.mxu0 %v888
      %967 = vmatmul.f32.gmra.mxu0 %v943
      %v968 = vpop.f32.mrf.mxu0
      %v969 = vadd.f32 %v937, %v968
      %970 = vmatmul.f32.gmra.mxu0 %v946
      %v971 = vpop.f32.mrf.mxu0
      %v972 = vadd.f32 %v940, %v971
      %973 = vdwg.mxu0
      %v974 = vld [vmem:[%s2 + $0x50] sm:$0xff]
      %v975 = vld [vmem:[%s2 + $0x58] sm:$0xff]
      %v976 = vld [vmem:[%s2 + $0x90] sm:$0xff]
      %v977 = vld [vmem:[%s2 + $0x98] sm:$0xff]
      %983 = vrot.lane.b32.xlu0 %v888, 127
      %v984 = vpop.permute.xlu0 %983
      %985 = vrot.lane.b32.xlu0 %v889, 127
      %v986 = vpop.permute.xlu0 %985
      %987 = vrot.lane.b32.xlu0 %v890, 127
      %v988 = vpop.permute.xlu0 %987
      %989 = vrot.lane.b32.xlu0 %v891, 127
      %v990 = vpop.permute.xlu0 %989
      %991 = vrot.lane.b32.xlu0 %v892, 127
      %v992 = vpop.permute.xlu0 %991
      %993 = vrot.lane.b32.xlu0 %v893, 127
      %v994 = vpop.permute.xlu0 %993
      %vm995 = vcmask 1039360
      %v996 = vsel %vm995, %v984, %v986
      %v997 = vsel %vm995, %v988, %v990
      %v998 = vsel %vm995, %v992, %v994
      %v1002 = vsel %vm606, %v974, 0
      %v1005 = vsel %vm606, %v975, 0
      %v1007 = vsel %vm613, %v998, 0
      %1009 = vmatpush.msra.mxu0 0.0
      %1010 = vmatpush.msra.mxu0 0.0
      %1011 = vmatpush.msra.mxu0 0.0
      %1012 = vmatpush.msra.mxu0 0.0
      %1013 = vmatpush.msra.mxu0 0.0
      %1014 = vmatpush.msra.mxu0 0.0
      %1015 = vmatpush.msra.mxu0 0.0
      %1016 = vmatpush.msra.mxu0 0.0
      %1017 = vmatpush.msra.mxu0 0.0
      %1018 = vmatpush.msra.mxu0 0.0
      %1019 = vmatpush.msra.mxu0 0.0
      %1020 = vmatpush.msra.mxu0 0.0
      %1021 = vmatpush.msra.mxu0 0.0
      %1022 = vmatpush.msra.mxu0 %v1007
      %1023 = vmatpush.msra.mxu0 %v997
      %1024 = vmatpush.msra.mxu0 %v996
      %1025 = vmatmul.f32.gmra.mxu0 %v1002
      %v1026 = vpop.f32.mrf.mxu0
      %v1027 = vadd.f32 0.0, %v1026
      %1028 = vmatmul.f32.gmra.mxu0 %v1005
      %v1029 = vpop.f32.mrf.mxu0
      %v1030 = vadd.f32 0.0, %v1029
      %1031 = vdwg.mxu0
      %v1032 = vadd.f32 %v969, %v1027
      %v1033 = vadd.f32 %v972, %v1030
      %1039 = vrot.lane.b32.xlu0 %v900, 127
      %v1040 = vpop.permute.xlu0 %1039
      %1041 = vrot.lane.b32.xlu0 %v901, 127
      %v1042 = vpop.permute.xlu0 %1041
      %1043 = vrot.lane.b32.xlu0 %v902, 127
      %v1044 = vpop.permute.xlu0 %1043
      %1045 = vrot.lane.b32.xlu0 %v903, 127
      %v1046 = vpop.permute.xlu0 %1045
      %1047 = vrot.lane.b32.xlu0 %v904, 127
      %v1048 = vpop.permute.xlu0 %1047
      %1049 = vrot.lane.b32.xlu0 %v905, 127
      %v1050 = vpop.permute.xlu0 %1049
      %v1051 = vsel %vm995, %v1040, %v1042
      %v1052 = vsel %vm995, %v1044, %v1046
      %v1053 = vsel %vm995, %v1048, %v1050
      %v1057 = vsel %vm606, %v976, 0
      %v1060 = vsel %vm606, %v977, 0
      %v1062 = vsel %vm613, %v1053, 0
      %1064 = vmatpush.msra.mxu0 0.0
      %1065 = vmatpush.msra.mxu0 0.0
      %1066 = vmatpush.msra.mxu0 0.0
      %1067 = vmatpush.msra.mxu0 0.0
      %1068 = vmatpush.msra.mxu0 0.0
      %1069 = vmatpush.msra.mxu0 0.0
      %1070 = vmatpush.msra.mxu0 0.0
      %1071 = vmatpush.msra.mxu0 0.0
      %1072 = vmatpush.msra.mxu0 0.0
      %1073 = vmatpush.msra.mxu0 0.0
      %1074 = vmatpush.msra.mxu0 0.0
      %1075 = vmatpush.msra.mxu0 0.0
      %1076 = vmatpush.msra.mxu0 0.0
      %1077 = vmatpush.msra.mxu0 %v1062
      %1078 = vmatpush.msra.mxu0 %v1052
      %1079 = vmatpush.msra.mxu0 %v1051
      %1080 = vmatmul.f32.gmra.mxu0 %v1057
      %v1081 = vpop.f32.mrf.mxu0
      %v1082 = vadd.f32 0.0, %v1081
      %1083 = vmatmul.f32.gmra.mxu0 %v1060
      %v1084 = vpop.f32.mrf.mxu0
      %v1085 = vadd.f32 0.0, %v1084
      %1086 = vdwg.mxu0
      %v1087 = vadd.f32 %v1032, %v1082
      %v1088 = vadd.f32 %v1033, %v1085
      %v1089 = vld [vmem:[%s2 + $0x60] sm:$0xff]
      %v1090 = vld [vmem:[%s2 + $0x68] sm:$0xff]
      %v1091 = vld [vmem:[%s2 + $0xa0] sm:$0xff]
      %v1092 = vld [vmem:[%s2 + $0xa8] sm:$0xff]
      %1093 = vrot.lane.b32.xlu0 %v888, 126
      %v1094 = vpop.permute.xlu0 %1093
      %1095 = vrot.lane.b32.xlu0 %v889, 126
      %v1096 = vpop.permute.xlu0 %1095
      %1097 = vrot.lane.b32.xlu0 %v890, 126
      %v1098 = vpop.permute.xlu0 %1097
      %1099 = vrot.lane.b32.xlu0 %v891, 126
      %v1100 = vpop.permute.xlu0 %1099
      %1101 = vrot.lane.b32.xlu0 %v892, 126
      %v1102 = vpop.permute.xlu0 %1101
      %1103 = vrot.lane.b32.xlu0 %v893, 126
      %v1104 = vpop.permute.xlu0 %1103
      %vm1105 = vcmask 1031168
      %v1106 = vsel %vm1105, %v1094, %v1096
      %v1107 = vsel %vm1105, %v1098, %v1100
      %v1108 = vsel %vm1105, %v1102, %v1104
      %v1112 = vsel %vm606, %v1089, 0
      %v1115 = vsel %vm606, %v1090, 0
      %v1117 = vsel %vm613, %v1108, 0
      %1119 = vmatpush.msra.mxu0 0.0
      %1120 = vmatpush.msra.mxu0 0.0
      %1121 = vmatpush.msra.mxu0 0.0
      %1122 = vmatpush.msra.mxu0 0.0
      %1123 = vmatpush.msra.mxu0 0.0
      %1124 = vmatpush.msra.mxu0 0.0
      %1125 = vmatpush.msra.mxu0 0.0
      %1126 = vmatpush.msra.mxu0 0.0
      %1127 = vmatpush.msra.mxu0 0.0
      %1128 = vmatpush.msra.mxu0 0.0
      %1129 = vmatpush.msra.mxu0 0.0
      %1130 = vmatpush.msra.mxu0 0.0
      %1131 = vmatpush.msra.mxu0 0.0
      %1132 = vmatpush.msra.mxu0 %v1117
      %1133 = vmatpush.msra.mxu0 %v1107
      %1134 = vmatpush.msra.mxu0 %v1106
      %1135 = vmatmul.f32.gmra.mxu0 %v1112
      %v1136 = vpop.f32.mrf.mxu0
      %v1137 = vadd.f32 0.0, %v1136
      %1138 = vmatmul.f32.gmra.mxu0 %v1115
      %v1139 = vpop.f32.mrf.mxu0
      %v1140 = vadd.f32 0.0, %v1139
      %1141 = vdwg.mxu0
      %v1142 = vadd.f32 %v1087, %v1137
      %v1143 = vadd.f32 %v1088, %v1140
      %1144 = vrot.lane.b32.xlu0 %v900, 126
      %v1145 = vpop.permute.xlu0 %1144
      %1146 = vrot.lane.b32.xlu0 %v901, 126
      %v1147 = vpop.permute.xlu0 %1146
      %1148 = vrot.lane.b32.xlu0 %v902, 126
      %v1149 = vpop.permute.xlu0 %1148
      %1150 = vrot.lane.b32.xlu0 %v903, 126
      %v1151 = vpop.permute.xlu0 %1150
      %1152 = vrot.lane.b32.xlu0 %v904, 126
      %v1153 = vpop.permute.xlu0 %1152
      %1154 = vrot.lane.b32.xlu0 %v905, 126
      %v1155 = vpop.permute.xlu0 %1154
      %v1156 = vsel %vm1105, %v1145, %v1147
      %v1157 = vsel %vm1105, %v1149, %v1151
      %v1158 = vsel %vm1105, %v1153, %v1155
      %v1162 = vsel %vm606, %v1091, 0
      %v1165 = vsel %vm606, %v1092, 0
      %v1167 = vsel %vm613, %v1158, 0
      %1169 = vmatpush.msra.mxu0 0.0
      %1170 = vmatpush.msra.mxu0 0.0
      %1171 = vmatpush.msra.mxu0 0.0
      %1172 = vmatpush.msra.mxu0 0.0
      %1173 = vmatpush.msra.mxu0 0.0
      %1174 = vmatpush.msra.mxu0 0.0
      %1175 = vmatpush.msra.mxu0 0.0
      %1176 = vmatpush.msra.mxu0 0.0
      %1177 = vmatpush.msra.mxu0 0.0
      %1178 = vmatpush.msra.mxu0 0.0
      %1179 = vmatpush.msra.mxu0 0.0
      %1180 = vmatpush.msra.mxu0 0.0
      %1181 = vmatpush.msra.mxu0 0.0
      %1182 = vmatpush.msra.mxu0 %v1167
      %1183 = vmatpush.msra.mxu0 %v1157
      %1184 = vmatpush.msra.mxu0 %v1156
      %1185 = vmatmul.f32.gmra.mxu0 %v1162
      %v1186 = vpop.f32.mrf.mxu0
      %v1187 = vadd.f32 0.0, %v1186
      %1188 = vmatmul.f32.gmra.mxu0 %v1165
      %v1189 = vpop.f32.mrf.mxu0
      %v1190 = vadd.f32 0.0, %v1189
      %1191 = vdwg.mxu0
      %v1192 = vadd.f32 %v1142, %v1187
      %v1193 = vadd.f32 %v1143, %v1190
      %v1194 = vld [vmem:[%s2 + $0x70] sm:$0xff]
      %v1195 = vld [vmem:[%s2 + $0x78] sm:$0xff]
      %v1196 = vld [vmem:[%s2 + $0xb0] sm:$0xff]
      %v1197 = vld [vmem:[%s2 + $0xb8] sm:$0xff]
      %1198 = vrot.lane.b32.xlu0 %v888, 125
      %v1199 = vpop.permute.xlu0 %1198
      %1200 = vrot.lane.b32.xlu0 %v889, 125
      %v1201 = vpop.permute.xlu0 %1200
      %1202 = vrot.lane.b32.xlu0 %v890, 125
      %v1203 = vpop.permute.xlu0 %1202
      %1204 = vrot.lane.b32.xlu0 %v891, 125
      %v1205 = vpop.permute.xlu0 %1204
      %1206 = vrot.lane.b32.xlu0 %v892, 125
      %v1207 = vpop.permute.xlu0 %1206
      %1208 = vrot.lane.b32.xlu0 %v893, 125
      %v1209 = vpop.permute.xlu0 %1208
      %vm1210 = vcmask 1022976
      %v1211 = vsel %vm1210, %v1199, %v1201
      %v1212 = vsel %vm1210, %v1203, %v1205
      %v1213 = vsel %vm1210, %v1207, %v1209
      %v1217 = vsel %vm606, %v1194, 0
      %v1220 = vsel %vm606, %v1195, 0
      %v1222 = vsel %vm613, %v1213, 0
      %1224 = vmatpush.msra.mxu0 0.0
      %1225 = vmatpush.msra.mxu0 0.0
      %1226 = vmatpush.msra.mxu0 0.0
      %1227 = vmatpush.msra.mxu0 0.0
      %1228 = vmatpush.msra.mxu0 0.0
      %1229 = vmatpush.msra.mxu0 0.0
      %1230 = vmatpush.msra.mxu0 0.0
      %1231 = vmatpush.msra.mxu0 0.0
      %1232 = vmatpush.msra.mxu0 0.0
      %1233 = vmatpush.msra.mxu0 0.0
      %1234 = vmatpush.msra.mxu0 0.0
      %1235 = vmatpush.msra.mxu0 0.0
      %1236 = vmatpush.msra.mxu0 0.0
      %1237 = vmatpush.msra.mxu0 %v1222
      %1238 = vmatpush.msra.mxu0 %v1212
      %1239 = vmatpush.msra.mxu0 %v1211
      %1240 = vmatmul.f32.gmra.mxu0 %v1217
      %v1241 = vpop.f32.mrf.mxu0
      %v1242 = vadd.f32 0.0, %v1241
      %1243 = vmatmul.f32.gmra.mxu0 %v1220
      %v1244 = vpop.f32.mrf.mxu0
      %v1245 = vadd.f32 0.0, %v1244
      %1246 = vdwg.mxu0
      %v1247 = vadd.f32 %v1192, %v1242
      %v1248 = vadd.f32 %v1193, %v1245
      %1249 = vrot.lane.b32.xlu0 %v900, 125
      %v1250 = vpop.permute.xlu0 %1249
      %1251 = vrot.lane.b32.xlu0 %v901, 125
      %v1252 = vpop.permute.xlu0 %1251
      %1253 = vrot.lane.b32.xlu0 %v902, 125
      %v1254 = vpop.permute.xlu0 %1253
      %1255 = vrot.lane.b32.xlu0 %v903, 125
      %v1256 = vpop.permute.xlu0 %1255
      %1257 = vrot.lane.b32.xlu0 %v904, 125
      %v1258 = vpop.permute.xlu0 %1257
      %1259 = vrot.lane.b32.xlu0 %v905, 125
      %v1260 = vpop.permute.xlu0 %1259
      %v1261 = vsel %vm1210, %v1250, %v1252
      %v1262 = vsel %vm1210, %v1254, %v1256
      %v1263 = vsel %vm1210, %v1258, %v1260
      %v1267 = vsel %vm606, %v1196, 0
      %v1270 = vsel %vm606, %v1197, 0
      %v1272 = vsel %vm613, %v1263, 0
      %1274 = vmatpush.msra.mxu0 0.0
      %1275 = vmatpush.msra.mxu0 0.0
      %1276 = vmatpush.msra.mxu0 0.0
      %1277 = vmatpush.msra.mxu0 0.0
      %1278 = vmatpush.msra.mxu0 0.0
      %1279 = vmatpush.msra.mxu0 0.0
      %1280 = vmatpush.msra.mxu0 0.0
      %1281 = vmatpush.msra.mxu0 0.0
      %1282 = vmatpush.msra.mxu0 0.0
      %1283 = vmatpush.msra.mxu0 0.0
      %1284 = vmatpush.msra.mxu0 0.0
      %1285 = vmatpush.msra.mxu0 0.0
      %1286 = vmatpush.msra.mxu0 0.0
      %1287 = vmatpush.msra.mxu0 %v1272
      %1288 = vmatpush.msra.mxu0 %v1262
      %1289 = vmatpush.msra.mxu0 %v1261
      %1290 = vmatmul.f32.gmra.mxu0 %v1267
      %v1291 = vpop.f32.mrf.mxu0
      %v1292 = vadd.f32 0.0, %v1291
      %1293 = vmatmul.f32.gmra.mxu0 %v1270
      %v1294 = vpop.f32.mrf.mxu0
      %v1295 = vadd.f32 0.0, %v1294
      %1296 = vdwg.mxu0
      %v1297 = vadd.f32 %v1247, %v1292
      %v1298 = vadd.f32 %v1248, %v1295
      %1299 = vst [vmem:[%s251] sm:$0xff] %v1297
      %s1300 = scalar_lea.vmem %s251, 8
      %1301 = vst [vmem:[%s1300] sm:$0xff] %v1298
      %p1302 = scmp.lt.s32.totalorder %s19, 1
      %s1303 = scalar_select %p1302, %s19, 1
      %p1304 = scmp.lt.s32.totalorder %s20, 0
      %s1305 = scalar_select %p1304, %s20, 0
      %s1306 = smul.addr %s1303, 2
      %s1307 = sadd.s32 %s1305, %s1306
      %s1308 = smul.addr %s1307, 8
      %s1309 = scalar_lea.vmem %s4, %s1308
      // Predicated region
      $region37: #{_tdanet_forward.3} parent=35 // pred_check
        %p1310 = pneg %p143
      $region38: #{_tdanet_forward.3} parent=35 // pred_check_branch
        %1312 = sbr.rel (%p1310) target = $region40
      $region39: #{_tdanet_forward.3} parent=35 // pred_region
        _
      $region40: #{_tdanet_forward.3} parent=35 // pred_fallthru
        _
    $region36: #{_tdanet_forward.3} parent=5 // pred_fallthru
      _
    %p1313 = scmp.le.s32.totalorder 2, %s10
    // Predicated region
    $region41: #{_tdanet_forward.3} parent=5 // pred_check
      %p1314 = pneg %p1313
    $region42: #{_tdanet_forward.3} parent=5 // pred_check_branch
      %1316 = sbr.rel (%p1314) target = $region44
    $region43: #{_tdanet_forward.3} parent=5 // pred_region
      %s1317 = ssub.s32 %s10, 2
      // Predicated region
      $region45: #{_tdanet_forward.3} parent=43 // pred_check
        %p1318 = pneg %p149
      $region46: #{_tdanet_forward.3} parent=43 // pred_check_branch
        %1320 = sbr.rel (%p1318) target = $region48
      $region47: #{_tdanet_forward.3} parent=43 // pred_region
        %p1321 = scmp.lt.s32.totalorder %s21, 1
        %s1322 = scalar_select %p1321, %s21, 1
        %p1323 = scmp.lt.s32.totalorder %s22, 0
        %s1324 = scalar_select %p1323, %s22, 0
        %s1325 = smul.addr %s1322, 2
        %s1326 = sadd.s32 %s1324, %s1325
        %s1327 = smul.addr %s1326, 8
        %s1328 = scalar_lea.vmem %s4, %s1327
      $region48: #{_tdanet_forward.3} parent=43 // pred_fallthru
        _
    $region44: #{_tdanet_forward.3} parent=5 // pred_fallthru
      _
  $region6: #{_tdanet_forward.3} parent=0 // loop_footer
    %s14 = sadd.s32 1, %s10
  $region7: #{_tdanet_forward.3} parent=0 // loop_footer_branch
    %9 = sbr.rel target = $region3
  $region8: #{_tdanet_forward.3} parent=0 // loop_exit
    _

</llo_original>
